<compile_context>
chip_gen: v6e
topology: v6e:2x2x1
jax: 0.10.0
libtpu: 0.0.40
codegen_flags: <defaults>
</compile_context>

<pallas_src>
import jax
import jax.numpy as jnp
from jax import lax
from jax.experimental import pallas as pl
from jax.experimental.pallas import tpu as pltpu

C_IN = 3
C_OUT = 16
HW = 32                     # spatial size implied by Linear(16*16*16, 10)
POOL_HW = 16
N_PIX = POOL_HW * POOL_HW   # 256 pooled pixels per image
N_TAPS = 9 * C_IN           # 27 im2col taps, k = ci*9 + dy*3 + dx
N_CLASSES = 10
OUT_PAD = 128               # lane-dense padded logits width


def _make_fused_kernel(b_tile: int):
    """Fused conv(3x3,p=1)+bias+ReLU+maxpool(2,2)+Linear(4096->10) for b_tile images."""
    S = b_tile * N_PIX  # pooled-lane slab width per pool quadrant

    def kernel(p_ref, wc_ref, bc_ref, w3_ref, bl_ref, out_ref):
        # p_ref : (1, 27, 4*S)      im2col patches; lane = q*S + b*256 + ph*16 + pw
        # wc_ref: (16, 27)          conv weight (cout, ci*9 + dy*3 + dx)
        # bc_ref: (16, 1)           conv bias
        # w3_ref: (16, 256, 128)    linear weight [cout, pooled pixel, class (zero-padded)]
        # bl_ref: (1, 128)          linear bias (zero-padded)
        # out_ref:(1, b_tile, 128)  padded logits
        # ---- conv: one MXU pass for every pixel of every image in the tile ----
        conv = jnp.dot(wc_ref[...], p_ref[0],
                       preferred_element_type=jnp.float32)          # (16, 4*S)
        # ---- 2x2 max-pool == elementwise max of the four S-wide lane slabs ----
        pooled = jnp.maximum(
            jnp.maximum(conv[:, 0:S], conv[:, S:2 * S]),
            jnp.maximum(conv[:, 2 * S:3 * S], conv[:, 3 * S:4 * S]))  # (16, S)
        # bias is constant per channel and ReLU is monotone, so bias/ReLU after the max
        # equals PyTorch's conv+bias -> ReLU -> maxpool exactly.
        act = jnp.maximum(pooled + bc_ref[...], 0.0)                  # (16, S)

        # ---- Linear(4096 -> 10): contract the pixel axis per conv channel and
        # accumulate, consuming the (16, S) tile in its native layout (no in-kernel
        # sublane->lane flatten).  Channel-outer loop: each w3[c] slab is read once.
        bl = bl_ref[...]                                              # (1, 128)
        logits = [bl] * b_tile
        for c in range(C_OUT):
            w3c = w3_ref[c]                                           # (256, 128)
            for b in range(b_tile):
                a_cb = act[c:c + 1, b * N_PIX:(b + 1) * N_PIX]        # (1, 256)
                logits[b] = logits[b] + jnp.dot(
                    a_cb, w3c, preferred_element_type=jnp.float32)
        for b in range(b_tile):
            out_ref[0, b, :] = logits[b][0].astype(out_ref.dtype)

    return kernel


def _pick_b_tile(n: int) -> int:
    if n <= 1:
        return 1
    # keep >= 2 grid steps (v7x has 2 TensorCores) while amortizing per-step overhead;
    # cap at 8 elements (~1 MiB of patches double-buffered) — far under scoped VMEM.
    return max(1, min(8, n // 2))


@jax.jit
def convnet3_forward(x_nchw, params):
    wc, bc, wl, bl = params          # (16,3,3,3), (16,), (10,4096), (10,)
    n = x_nchw.shape[0]
    assert x_nchw.shape[1:] == (C_IN, HW, HW)
    b_tile = _pick_b_tile(n)
    n_blocks = -(-n // b_tile)
    n_pad = n_blocks * b_tile
    S = b_tile * N_PIX

    # ---- im2col glue (single fused XLA producer under jit) ----
    # P[i, k, q*S + b*256 + ph*16 + pw] = xpad[i*b_tile + b, ci, ph*2+a+dy, pw*2+bq+dx],
    # with k = ci*9 + dy*3 + dx and q = a*2 + bq (pool-window position).
    xpad = jnp.pad(x_nchw, ((0, 0), (0, 0), (1, 1), (1, 1)))               # (N,3,34,34)
    taps = [xpad[:, :, dy:dy + HW, dx:dx + HW] for dy in range(3) for dx in range(3)]
    patches = jnp.stack(taps, axis=2).reshape(n, N_TAPS, HW, HW)           # (N,27,32,32)
    patches = jnp.pad(patches, ((0, n_pad - n), (0, 0), (0, 0), (0, 0)))
    p_im2col = (patches.reshape(n_blocks, b_tile, N_TAPS, POOL_HW, 2, POOL_HW, 2)
                .transpose(0, 2, 4, 6, 1, 3, 5)      # (i, k, a, bq, b, ph, pw)
                .reshape(n_blocks, N_TAPS, 4 * S))

    wc_mat = wc.reshape(C_OUT, N_TAPS)                                     # (16, 27)
    bc_col = bc.reshape(C_OUT, 1)                                          # (16, 1)
    # torch's NCHW flatten after the pool is c*256 + ph*16 + pw == the kernel's layout,
    # so the linear weight only needs a reshape + zero-pad of the class axis to 128.
    w3 = jnp.transpose(wl.reshape(N_CLASSES, C_OUT, N_PIX), (1, 2, 0))     # (16, 256, 10)
    w3 = jnp.pad(w3, ((0, 0), (0, 0), (0, OUT_PAD - N_CLASSES)))           # (16, 256, 128)
    bl_row = jnp.pad(bl.reshape(1, N_CLASSES), ((0, 0), (0, OUT_PAD - N_CLASSES)))

    out3 = pl.pallas_call(
        _make_fused_kernel(b_tile),
        out_shape=jax.ShapeDtypeStruct((n_blocks, b_tile, OUT_PAD), jnp.float32),
        grid_spec=pltpu.PrefetchScalarGridSpec(
            num_scalar_prefetch=0,
            grid=(n_blocks,),
            in_specs=[
                pl.BlockSpec((1, N_TAPS, 4 * S), lambda i: (i, 0, 0)),
                pl.BlockSpec((C_OUT, N_TAPS), lambda i: (0, 0)),
                pl.BlockSpec((C_OUT, 1), lambda i: (0, 0)),
                pl.BlockSpec((C_OUT, N_PIX, OUT_PAD), lambda i: (0, 0, 0)),
                pl.BlockSpec((1, OUT_PAD), lambda i: (0, 0)),
            ],
            out_specs=pl.BlockSpec((1, b_tile, OUT_PAD), lambda i: (i, 0, 0)),
        ),
        compiler_params=pltpu.CompilerParams(dimension_semantics=("parallel",)),
    )(p_im2col, wc_mat, bc_col, w3, bl_row)

    return out3.reshape(n_pad, OUT_PAD)[:n, :N_CLASSES]


def convnet3_reference(x_nchw, params):
    """Pure-JAX reference reproducing the PyTorch forward (NCHW semantics)."""
    wc, bc, wl, bl = params
    y = lax.conv_general_dilated(
        x_nchw, wc, window_strides=(1, 1), padding=((1, 1), (1, 1)),
        dimension_numbers=("NCHW", "OIHW", "NCHW"))
    y = y + bc.reshape(1, -1, 1, 1)
    y = jnp.maximum(y, 0.0)
    y = lax.reduce_window(y, -jnp.inf, lax.max, (1, 1, 2, 2), (1, 1, 2, 2), "VALID")
    y = y.reshape(y.shape[0], -1)   # NCHW flatten, same as torch.flatten
    return y @ wl.T + bl


if __name__ == "__main__":
    key = jax.random.PRNGKey(0)
    kx, kwc, kbc, kwl, kbl = jax.random.split(key, 5)

    # deterministic synthetic parameters (shapes from ConvNet3.__init__)
    x = jax.random.normal(kx, (2, 3, 32, 32), dtype=jnp.float32)
    wc = jax.random.normal(kwc, (16, 3, 3, 3), dtype=jnp.float32) * 0.1
    bc = jax.random.normal(kbc, (16,), dtype=jnp.float32) * 0.1
    wl = jax.random.normal(kwl, (10, 16 * 16 * 16), dtype=jnp.float32) * 0.02
    bl = jax.random.normal(kbl, (10,), dtype=jnp.float32) * 0.1
    params = (wc, bc, wl, bl)

    out = convnet3_forward(x, params)
    out = jax.block_until_ready(out)

    ref = convnet3_reference(x, params)
    assert out.shape == (2, 10)
    if not bool(jnp.allclose(out, ref, rtol=1e-3, atol=1e-3)):
        raise AssertionError("Pallas output does not match reference")
    print("KERNEL_OK")
</pallas_src>

<mosaic_0001>
module attributes {stable_mosaic.version = 11 : i64} {
  func.func @kernel(%arg0: i32, %arg1: memref<1x27x1024xf32, #tpu.memory_space<vmem>>, %arg2: memref<16x27xf32, #tpu.memory_space<vmem>>, %arg3: memref<16x1xf32, #tpu.memory_space<vmem>>, %arg4: memref<16x256x128xf32, #tpu.memory_space<vmem>>, %arg5: memref<1x128xf32, #tpu.memory_space<vmem>>, %arg6: memref<1x1x128xf32, #tpu.memory_space<vmem>>) attributes {dimension_semantics = [#tpu.dimension_semantics<parallel>], iteration_bounds = array<i64: 2>, scalar_prefetch = 0 : i64, scratch_operands = 0 : i64, tpu.core_type = #tpu.core_type<tc>, window_params = [{transform_indices = @transform_0, window_bounds = array<i64: 1, 27, 1024>}, {pipeline_mode = #tpu.pipeline_mode<synchronous>, transform_indices = @transform_1, window_bounds = array<i64: 16, 27>}, {pipeline_mode = #tpu.pipeline_mode<synchronous>, transform_indices = @transform_2, window_bounds = array<i64: 16, 1>}, {pipeline_mode = #tpu.pipeline_mode<synchronous>, transform_indices = @transform_3, window_bounds = array<i64: 16, 256, 128>}, {pipeline_mode = #tpu.pipeline_mode<synchronous>, transform_indices = @transform_4, window_bounds = array<i64: 1, 128>}, {transform_indices = @transform_5, window_bounds = array<i64: 1, 1, 128>}]} {
    %c0 = arith.constant 0 : index
    %c0_0 = arith.constant 0 : index
    %0 = vector.load %arg2[%c0, %c0_0] : memref<16x27xf32, #tpu.memory_space<vmem>>, vector<16x27xf32>
    %c0_1 = arith.constant 0 : index
    %c0_2 = arith.constant 0 : index
    %c0_3 = arith.constant 0 : index
    %1 = vector.load %arg1[%c0_1, %c0_2, %c0_3] : memref<1x27x1024xf32, #tpu.memory_space<vmem>>, vector<1x27x1024xf32>
    %2 = vector.shape_cast %1 : vector<1x27x1024xf32> to vector<27x1024xf32>
    %cst = arith.constant dense<0.000000e+00> : vector<16x1024xf32>
    %3 = tpu.matmul %0, %2, %cst {dimension_numbers = #tpu.dot_dimension_numbers<[1], [0], [0], [1], [0, 0, 1, 1], [], []>} : vector<16x27xf32>, vector<27x1024xf32>, vector<16x1024xf32> -> vector<16x1024xf32>
    %4 = vector.extract_strided_slice %3 {offsets = [0, 0], sizes = [16, 256], strides = [1, 1]} : vector<16x1024xf32> to vector<16x256xf32>
    %5 = vector.extract_strided_slice %3 {offsets = [0, 256], sizes = [16, 256], strides = [1, 1]} : vector<16x1024xf32> to vector<16x256xf32>
    %6 = arith.maximumf %4, %5 : vector<16x256xf32>
    %7 = vector.extract_strided_slice %3 {offsets = [0, 512], sizes = [16, 256], strides = [1, 1]} : vector<16x1024xf32> to vector<16x256xf32>
    %8 = vector.extract_strided_slice %3 {offsets = [0, 768], sizes = [16, 256], strides = [1, 1]} : vector<16x1024xf32> to vector<16x256xf32>
    %9 = arith.maximumf %7, %8 : vector<16x256xf32>
    %10 = arith.maximumf %6, %9 : vector<16x256xf32>
    %c0_4 = arith.constant 0 : index
    %c0_5 = arith.constant 0 : index
    %11 = vector.load %arg3[%c0_4, %c0_5] : memref<16x1xf32, #tpu.memory_space<vmem>>, vector<16x1xf32>
    %12 = vector.broadcast %11 : vector<16x1xf32> to vector<16x256xf32>
    %13 = arith.addf %10, %12 : vector<16x256xf32>
    %cst_6 = arith.constant 0.000000e+00 : f32
    %14 = vector.broadcast %cst_6 : f32 to vector<16x256xf32>
    %15 = arith.maximumf %13, %14 : vector<16x256xf32>
    %c0_7 = arith.constant 0 : index
    %c0_8 = arith.constant 0 : index
    %16 = vector.load %arg5[%c0_7, %c0_8] : memref<1x128xf32, #tpu.memory_space<vmem>>, vector<1x128xf32>
    %c0_9 = arith.constant 0 : index
    %c0_10 = arith.constant 0 : index
    %c0_11 = arith.constant 0 : index
    %17 = vector.load %arg4[%c0_9, %c0_10, %c0_11] : memref<16x256x128xf32, #tpu.memory_space<vmem>>, vector<1x256x128xf32>
    %18 = vector.shape_cast %17 : vector<1x256x128xf32> to vector<256x128xf32>
    %19 = vector.extract_strided_slice %15 {offsets = [0, 0], sizes = [1, 256], strides = [1, 1]} : vector<16x256xf32> to vector<1x256xf32>
    %cst_12 = arith.constant dense<0.000000e+00> : vector<1x128xf32>
    %20 = tpu.matmul %19, %18, %cst_12 {dimension_numbers = #tpu.dot_dimension_numbers<[1], [0], [0], [1], [0, 0, 1, 1], [], []>} : vector<1x256xf32>, vector<256x128xf32>, vector<1x128xf32> -> vector<1x128xf32>
    %21 = arith.addf %16, %20 : vector<1x128xf32>
    %c1 = arith.constant 1 : index
    %c0_13 = arith.constant 0 : index
    %c0_14 = arith.constant 0 : index
    %22 = vector.load %arg4[%c1, %c0_13, %c0_14] : memref<16x256x128xf32, #tpu.memory_space<vmem>>, vector<1x256x128xf32>
    %23 = vector.shape_cast %22 : vector<1x256x128xf32> to vector<256x128xf32>
    %24 = vector.extract_strided_slice %15 {offsets = [1, 0], sizes = [1, 256], strides = [1, 1]} : vector<16x256xf32> to vector<1x256xf32>
    %cst_15 = arith.constant dense<0.000000e+00> : vector<1x128xf32>
    %25 = tpu.matmul %24, %23, %cst_15 {dimension_numbers = #tpu.dot_dimension_numbers<[1], [0], [0], [1], [0, 0, 1, 1], [], []>} : vector<1x256xf32>, vector<256x128xf32>, vector<1x128xf32> -> vector<1x128xf32>
    %26 = arith.addf %21, %25 : vector<1x128xf32>
    %c2 = arith.constant 2 : index
    %c0_16 = arith.constant 0 : index
    %c0_17 = arith.constant 0 : index
    %27 = vector.load %arg4[%c2, %c0_16, %c0_17] : memref<16x256x128xf32, #tpu.memory_space<vmem>>, vector<1x256x128xf32>
    %28 = vector.shape_cast %27 : vector<1x256x128xf32> to vector<256x128xf32>
    %29 = vector.extract_strided_slice %15 {offsets = [2, 0], sizes = [1, 256], strides = [1, 1]} : vector<16x256xf32> to vector<1x256xf32>
    %cst_18 = arith.constant dense<0.000000e+00> : vector<1x128xf32>
    %30 = tpu.matmul %29, %28, %cst_18 {dimension_numbers = #tpu.dot_dimension_numbers<[1], [0], [0], [1], [0, 0, 1, 1], [], []>} : vector<1x256xf32>, vector<256x128xf32>, vector<1x128xf32> -> vector<1x128xf32>
    %31 = arith.addf %26, %30 : vector<1x128xf32>
    %c3 = arith.constant 3 : index
    %c0_19 = arith.constant 0 : index
    %c0_20 = arith.constant 0 : index
    %32 = vector.load %arg4[%c3, %c0_19, %c0_20] : memref<16x256x128xf32, #tpu.memory_space<vmem>>, vector<1x256x128xf32>
    %33 = vector.shape_cast %32 : vector<1x256x128xf32> to vector<256x128xf32>
    %34 = vector.extract_strided_slice %15 {offsets = [3, 0], sizes = [1, 256], strides = [1, 1]} : vector<16x256xf32> to vector<1x256xf32>
    %cst_21 = arith.constant dense<0.000000e+00> : vector<1x128xf32>
    %35 = tpu.matmul %34, %33, %cst_21 {dimension_numbers = #tpu.dot_dimension_numbers<[1], [0], [0], [1], [0, 0, 1, 1], [], []>} : vector<1x256xf32>, vector<256x128xf32>, vector<1x128xf32> -> vector<1x128xf32>
    %36 = arith.addf %31, %35 : vector<1x128xf32>
    %c4 = arith.constant 4 : index
    %c0_22 = arith.constant 0 : index
    %c0_23 = arith.constant 0 : index
    %37 = vector.load %arg4[%c4, %c0_22, %c0_23] : memref<16x256x128xf32, #tpu.memory_space<vmem>>, vector<1x256x128xf32>
    %38 = vector.shape_cast %37 : vector<1x256x128xf32> to vector<256x128xf32>
    %39 = vector.extract_strided_slice %15 {offsets = [4, 0], sizes = [1, 256], strides = [1, 1]} : vector<16x256xf32> to vector<1x256xf32>
    %cst_24 = arith.constant dense<0.000000e+00> : vector<1x128xf32>
    %40 = tpu.matmul %39, %38, %cst_24 {dimension_numbers = #tpu.dot_dimension_numbers<[1], [0], [0], [1], [0, 0, 1, 1], [], []>} : vector<1x256xf32>, vector<256x128xf32>, vector<1x128xf32> -> vector<1x128xf32>
    %41 = arith.addf %36, %40 : vector<1x128xf32>
    %c5 = arith.constant 5 : index
    %c0_25 = arith.constant 0 : index
    %c0_26 = arith.constant 0 : index
    %42 = vector.load %arg4[%c5, %c0_25, %c0_26] : memref<16x256x128xf32, #tpu.memory_space<vmem>>, vector<1x256x128xf32>
    %43 = vector.shape_cast %42 : vector<1x256x128xf32> to vector<256x128xf32>
    %44 = vector.extract_strided_slice %15 {offsets = [5, 0], sizes = [1, 256], strides = [1, 1]} : vector<16x256xf32> to vector<1x256xf32>
    %cst_27 = arith.constant dense<0.000000e+00> : vector<1x128xf32>
    %45 = tpu.matmul %44, %43, %cst_27 {dimension_numbers = #tpu.dot_dimension_numbers<[1], [0], [0], [1], [0, 0, 1, 1], [], []>} : vector<1x256xf32>, vector<256x128xf32>, vector<1x128xf32> -> vector<1x128xf32>
    %46 = arith.addf %41, %45 : vector<1x128xf32>
    %c6 = arith.constant 6 : index
    %c0_28 = arith.constant 0 : index
    %c0_29 = arith.constant 0 : index
    %47 = vector.load %arg4[%c6, %c0_28, %c0_29] : memref<16x256x128xf32, #tpu.memory_space<vmem>>, vector<1x256x128xf32>
    %48 = vector.shape_cast %47 : vector<1x256x128xf32> to vector<256x128xf32>
    %49 = vector.extract_strided_slice %15 {offsets = [6, 0], sizes = [1, 256], strides = [1, 1]} : vector<16x256xf32> to vector<1x256xf32>
    %cst_30 = arith.constant dense<0.000000e+00> : vector<1x128xf32>
    %50 = tpu.matmul %49, %48, %cst_30 {dimension_numbers = #tpu.dot_dimension_numbers<[1], [0], [0], [1], [0, 0, 1, 1], [], []>} : vector<1x256xf32>, vector<256x128xf32>, vector<1x128xf32> -> vector<1x128xf32>
    %51 = arith.addf %46, %50 : vector<1x128xf32>
    %c7 = arith.constant 7 : index
    %c0_31 = arith.constant 0 : index
    %c0_32 = arith.constant 0 : index
    %52 = vector.load %arg4[%c7, %c0_31, %c0_32] : memref<16x256x128xf32, #tpu.memory_space<vmem>>, vector<1x256x128xf32>
    %53 = vector.shape_cast %52 : vector<1x256x128xf32> to vector<256x128xf32>
    %54 = vector.extract_strided_slice %15 {offsets = [7, 0], sizes = [1, 256], strides = [1, 1]} : vector<16x256xf32> to vector<1x256xf32>
    %cst_33 = arith.constant dense<0.000000e+00> : vector<1x128xf32>
    %55 = tpu.matmul %54, %53, %cst_33 {dimension_numbers = #tpu.dot_dimension_numbers<[1], [0], [0], [1], [0, 0, 1, 1], [], []>} : vector<1x256xf32>, vector<256x128xf32>, vector<1x128xf32> -> vector<1x128xf32>
    %56 = arith.addf %51, %55 : vector<1x128xf32>
    %c8 = arith.constant 8 : index
    %c0_34 = arith.constant 0 : index
    %c0_35 = arith.constant 0 : index
    %57 = vector.load %arg4[%c8, %c0_34, %c0_35] : memref<16x256x128xf32, #tpu.memory_space<vmem>>, vector<1x256x128xf32>
    %58 = vector.shape_cast %57 : vector<1x256x128xf32> to vector<256x128xf32>
    %59 = vector.extract_strided_slice %15 {offsets = [8, 0], sizes = [1, 256], strides = [1, 1]} : vector<16x256xf32> to vector<1x256xf32>
    %cst_36 = arith.constant dense<0.000000e+00> : vector<1x128xf32>
    %60 = tpu.matmul %59, %58, %cst_36 {dimension_numbers = #tpu.dot_dimension_numbers<[1], [0], [0], [1], [0, 0, 1, 1], [], []>} : vector<1x256xf32>, vector<256x128xf32>, vector<1x128xf32> -> vector<1x128xf32>
    %61 = arith.addf %56, %60 : vector<1x128xf32>
    %c9 = arith.constant 9 : index
    %c0_37 = arith.constant 0 : index
    %c0_38 = arith.constant 0 : index
    %62 = vector.load %arg4[%c9, %c0_37, %c0_38] : memref<16x256x128xf32, #tpu.memory_space<vmem>>, vector<1x256x128xf32>
    %63 = vector.shape_cast %62 : vector<1x256x128xf32> to vector<256x128xf32>
    %64 = vector.extract_strided_slice %15 {offsets = [9, 0], sizes = [1, 256], strides = [1, 1]} : vector<16x256xf32> to vector<1x256xf32>
    %cst_39 = arith.constant dense<0.000000e+00> : vector<1x128xf32>
    %65 = tpu.matmul %64, %63, %cst_39 {dimension_numbers = #tpu.dot_dimension_numbers<[1], [0], [0], [1], [0, 0, 1, 1], [], []>} : vector<1x256xf32>, vector<256x128xf32>, vector<1x128xf32> -> vector<1x128xf32>
    %66 = arith.addf %61, %65 : vector<1x128xf32>
    %c10 = arith.constant 10 : index
    %c0_40 = arith.constant 0 : index
    %c0_41 = arith.constant 0 : index
    %67 = vector.load %arg4[%c10, %c0_40, %c0_41] : memref<16x256x128xf32, #tpu.memory_space<vmem>>, vector<1x256x128xf32>
    %68 = vector.shape_cast %67 : vector<1x256x128xf32> to vector<256x128xf32>
    %69 = vector.extract_strided_slice %15 {offsets = [10, 0], sizes = [1, 256], strides = [1, 1]} : vector<16x256xf32> to vector<1x256xf32>
    %cst_42 = arith.constant dense<0.000000e+00> : vector<1x128xf32>
    %70 = tpu.matmul %69, %68, %cst_42 {dimension_numbers = #tpu.dot_dimension_numbers<[1], [0], [0], [1], [0, 0, 1, 1], [], []>} : vector<1x256xf32>, vector<256x128xf32>, vector<1x128xf32> -> vector<1x128xf32>
    %71 = arith.addf %66, %70 : vector<1x128xf32>
    %c11 = arith.constant 11 : index
    %c0_43 = arith.constant 0 : index
    %c0_44 = arith.constant 0 : index
    %72 = vector.load %arg4[%c11, %c0_43, %c0_44] : memref<16x256x128xf32, #tpu.memory_space<vmem>>, vector<1x256x128xf32>
    %73 = vector.shape_cast %72 : vector<1x256x128xf32> to vector<256x128xf32>
    %74 = vector.extract_strided_slice %15 {offsets = [11, 0], sizes = [1, 256], strides = [1, 1]} : vector<16x256xf32> to vector<1x256xf32>
    %cst_45 = arith.constant dense<0.000000e+00> : vector<1x128xf32>
    %75 = tpu.matmul %74, %73, %cst_45 {dimension_numbers = #tpu.dot_dimension_numbers<[1], [0], [0], [1], [0, 0, 1, 1], [], []>} : vector<1x256xf32>, vector<256x128xf32>, vector<1x128xf32> -> vector<1x128xf32>
    %76 = arith.addf %71, %75 : vector<1x128xf32>
    %c12 = arith.constant 12 : index
    %c0_46 = arith.constant 0 : index
    %c0_47 = arith.constant 0 : index
    %77 = vector.load %arg4[%c12, %c0_46, %c0_47] : memref<16x256x128xf32, #tpu.memory_space<vmem>>, vector<1x256x128xf32>
    %78 = vector.shape_cast %77 : vector<1x256x128xf32> to vector<256x128xf32>
    %79 = vector.extract_strided_slice %15 {offsets = [12, 0], sizes = [1, 256], strides = [1, 1]} : vector<16x256xf32> to vector<1x256xf32>
    %cst_48 = arith.constant dense<0.000000e+00> : vector<1x128xf32>
    %80 = tpu.matmul %79, %78, %cst_48 {dimension_numbers = #tpu.dot_dimension_numbers<[1], [0], [0], [1], [0, 0, 1, 1], [], []>} : vector<1x256xf32>, vector<256x128xf32>, vector<1x128xf32> -> vector<1x128xf32>
    %81 = arith.addf %76, %80 : vector<1x128xf32>
    %c13 = arith.constant 13 : index
    %c0_49 = arith.constant 0 : index
    %c0_50 = arith.constant 0 : index
    %82 = vector.load %arg4[%c13, %c0_49, %c0_50] : memref<16x256x128xf32, #tpu.memory_space<vmem>>, vector<1x256x128xf32>
    %83 = vector.shape_cast %82 : vector<1x256x128xf32> to vector<256x128xf32>
    %84 = vector.extract_strided_slice %15 {offsets = [13, 0], sizes = [1, 256], strides = [1, 1]} : vector<16x256xf32> to vector<1x256xf32>
    %cst_51 = arith.constant dense<0.000000e+00> : vector<1x128xf32>
    %85 = tpu.matmul %84, %83, %cst_51 {dimension_numbers = #tpu.dot_dimension_numbers<[1], [0], [0], [1], [0, 0, 1, 1], [], []>} : vector<1x256xf32>, vector<256x128xf32>, vector<1x128xf32> -> vector<1x128xf32>
    %86 = arith.addf %81, %85 : vector<1x128xf32>
    %c14 = arith.constant 14 : index
    %c0_52 = arith.constant 0 : index
    %c0_53 = arith.constant 0 : index
    %87 = vector.load %arg4[%c14, %c0_52, %c0_53] : memref<16x256x128xf32, #tpu.memory_space<vmem>>, vector<1x256x128xf32>
    %88 = vector.shape_cast %87 : vector<1x256x128xf32> to vector<256x128xf32>
    %89 = vector.extract_strided_slice %15 {offsets = [14, 0], sizes = [1, 256], strides = [1, 1]} : vector<16x256xf32> to vector<1x256xf32>
    %cst_54 = arith.constant dense<0.000000e+00> : vector<1x128xf32>
    %90 = tpu.matmul %89, %88, %cst_54 {dimension_numbers = #tpu.dot_dimension_numbers<[1], [0], [0], [1], [0, 0, 1, 1], [], []>} : vector<1x256xf32>, vector<256x128xf32>, vector<1x128xf32> -> vector<1x128xf32>
    %91 = arith.addf %86, %90 : vector<1x128xf32>
    %c15 = arith.constant 15 : index
    %c0_55 = arith.constant 0 : index
    %c0_56 = arith.constant 0 : index
    %92 = vector.load %arg4[%c15, %c0_55, %c0_56] : memref<16x256x128xf32, #tpu.memory_space<vmem>>, vector<1x256x128xf32>
    %93 = vector.shape_cast %92 : vector<1x256x128xf32> to vector<256x128xf32>
    %94 = vector.extract_strided_slice %15 {offsets = [15, 0], sizes = [1, 256], strides = [1, 1]} : vector<16x256xf32> to vector<1x256xf32>
    %cst_57 = arith.constant dense<0.000000e+00> : vector<1x128xf32>
    %95 = tpu.matmul %94, %93, %cst_57 {dimension_numbers = #tpu.dot_dimension_numbers<[1], [0], [0], [1], [0, 0, 1, 1], [], []>} : vector<1x256xf32>, vector<256x128xf32>, vector<1x128xf32> -> vector<1x128xf32>
    %96 = arith.addf %91, %95 : vector<1x128xf32>
    %97 = vector.shape_cast %96 : vector<1x128xf32> to vector<128xf32>
    %c0_58 = arith.constant 0 : index
    %c0_59 = arith.constant 0 : index
    %c0_60 = arith.constant 0 : index
    %98 = vector.load %arg6[%c0_58, %c0_59, %c0_60] : memref<1x1x128xf32, #tpu.memory_space<vmem>>, vector<1x1x128xf32>
    %99 = vector.shape_cast %98 : vector<1x1x128xf32> to vector<128xf32>
    %100 = vector.shape_cast %97 : vector<128xf32> to vector<1x1x128xf32>
    tpu.vector_store %arg6[%c0_58, %c0_59, %c0_60], %100 {strides = array<i32>} : memref<1x1x128xf32, #tpu.memory_space<vmem>>, vector<1x1x128xf32>,
    return
  }
  func.func @transform_0(%arg0: i32) -> (i32, i32, i32) {
    %c0_i32 = arith.constant 0 : i32
    %c0_i32_0 = arith.constant 0 : i32
    %c0_i32_1 = arith.constant 0 : i32
    return %arg0, %c0_i32, %c0_i32_0 : i32, i32, i32
  }
  func.func @transform_1(%arg0: i32) -> (i32, i32) {
    %c0_i32 = arith.constant 0 : i32
    %c0_i32_0 = arith.constant 0 : i32
    %c0_i32_1 = arith.constant 0 : i32
    return %c0_i32, %c0_i32_0 : i32, i32
  }
  func.func @transform_2(%arg0: i32) -> (i32, i32) {
    %c0_i32 = arith.constant 0 : i32
    %c0_i32_0 = arith.constant 0 : i32
    %c0_i32_1 = arith.constant 0 : i32
    return %c0_i32, %c0_i32_0 : i32, i32
  }
  func.func @transform_3(%arg0: i32) -> (i32, i32, i32) {
    %c0_i32 = arith.constant 0 : i32
    %c0_i32_0 = arith.constant 0 : i32
    %c0_i32_1 = arith.constant 0 : i32
    %c0_i32_2 = arith.constant 0 : i32
    return %c0_i32, %c0_i32_0, %c0_i32_1 : i32, i32, i32
  }
  func.func @transform_4(%arg0: i32) -> (i32, i32) {
    %c0_i32 = arith.constant 0 : i32
    %c0_i32_0 = arith.constant 0 : i32
    %c0_i32_1 = arith.constant 0 : i32
    return %c0_i32, %c0_i32_0 : i32, i32
  }
  func.func @transform_5(%arg0: i32) -> (i32, i32, i32) {
    %c0_i32 = arith.constant 0 : i32
    %c0_i32_0 = arith.constant 0 : i32
    %c0_i32_1 = arith.constant 0 : i32
    return %arg0, %c0_i32, %c0_i32_0 : i32, i32, i32
  }
}

</mosaic_0001>

<llo_original>
// kernel: convnet3_forward.1
$region0: #{convnet3_forward.1}
  #allocation0 [shape = 'u32[]', space=smem, size = 0x4, offset = 0x4, fixed_abs, tag = 'smem constant byte address 0x4 - core index']
  #allocation1 [shape = 'u32[144,128]{1,0:T(1,128)}', space=vmem, size = 0x12000, scoped, tag = 'internal scratch']
  %s0 = inlined_call_operand.vmem [shape: f32[2,27,1024], index: 0, kind: input, shape index: {}]
  %s1 = inlined_call_operand.vmem [shape: f32[16,27], index: 1, kind: input, shape index: {}]
  %s2 = inlined_call_operand.vmem [shape: f32[16,1], index: 2, kind: input, shape index: {}]
  %s3 = inlined_call_operand.vmem [shape: f32[16,256,128], index: 3, kind: input, shape index: {}]
  %s4 = inlined_call_operand.vmem [shape: f32[1,128], index: 4, kind: input, shape index: {}]
  %s5 = inlined_call_operand.hbm [shape: f32[2,1,128], index: 5, kind: output, shape index: {}]
  %s6 = sld [smem:[#allocation0]]
  $region53: #{convnet3_forward.1} parent=0
    _
  %s8 = ssub.s32 1, %s6
  %s9 = scalar_select 0, %s8, %s6
  $region1: #{convnet3_forward.1} parent=0
    #allocation2 [shape = 'u8[1024]{0}', space=vmem, size = 0x400, scoped, tag = 'output window, operand 0']
    #allocation3 [shape = 's32[2]{0}', space=sflag, size = 0x8, scoped, tag = 'scoped memory for convnet3_forward.1']
    %10 = vsyncpa [#allocation3], 0
    %s11 = scalar_lea.sflag [#allocation3], 1
    %12 = vsyncpa %s11, 0
    loop: start=0, step=1, limit=4
    $region2: #{convnet3_forward.1} parent=1 // loop_pre_header
      _
    $region3: #{convnet3_forward.1} parent=1 // loop_header
      %s14 = sphi 0, %s18
      %p15 = scmp.ge.s32.totalorder %s14, 4
      %s24 = sphi 0, %s26
      %s27 = sphi 0, %s24
      %s28 = sphi 0, %s27
      %s44 = sphi 0, %s28
      %s48 = sphi 0, %s48
      %s50 = sphi 0, %s48
      %s51 = sphi 0, %s50
      %s65 = sphi 0, %s51
      %s69 = sphi 0, %s69
      %s71 = sphi 0, %s69
      %s72 = sphi 0, %s71
      %s86 = sphi 0, %s72
      %s90 = sphi 0, %s90
      %s92 = sphi 0, %s90
      %s93 = sphi 0, %s92
      %s107 = sphi 0, %s93
      %s111 = sphi 0, %s111
      %s113 = sphi 0, %s111
      %s114 = sphi 0, %s113
      %s128 = sphi 0, %s114
      %s134 = sphi 0, %s136
      %s137 = sphi 0, %s134
      %s138 = sphi 0, %s137
      %s154 = sphi 0, %s138
    $region4: #{convnet3_forward.1} parent=1 // loop_header_branch
      %17 = sbr.rel (%p15) target = $region8
    $region5: #{convnet3_forward.1} parent=1 // loop_body
      %s19 = ssub.s32 %s14, 1
      %s20 = ssub.s32 %s14, 2
      %s21 = sadd.s32 %s14, 1
      %s22 = ssub.s32 %s14, %s21
      %p23 = scmp.eq.s32.totalorder %s22, 0
      %s25 = sadd.s32 %s24, 1
      %s26 = scalar_select %p23, %s24, %s25
      %p29 = pneg %p23
      %p30 = scmp.eq.s32.totalorder %s14, 1
      %p31 = por %p29, %p30
      %p32 = scmp.ne.s32.totalorder %s24, %s27
      %p33 = scmp.eq.s32.totalorder %s14, 0
      %p34 = por %p32, %p33
      %p35 = scmp.ne.s32.totalorder %s24, %s27
      %p36 = scmp.eq.s32.totalorder %s19, 1
      %p37 = por %p35, %p36
      %p38 = scmp.ne.s32.totalorder %s27, %s28
      %p39 = scmp.eq.s32.totalorder %s19, 0
      %p40 = por %p38, %p39
      %p41 = scmp.ne.s32.totalorder %s27, %s28
      %p42 = scmp.eq.s32.totalorder %s20, 1
      %p43 = por %p41, %p42
      %p45 = scmp.ne.s32.totalorder %s28, %s44
      %p46 = scmp.eq.s32.totalorder %s20, 0
      %p47 = por %p45, %p46
      %s49 = sadd.s32 %s48, 1
      %p52 = scmp.eq.s32.totalorder %s14, 1
      %p53 = scmp.ne.s32.totalorder %s48, %s50
      %p54 = scmp.eq.s32.totalorder %s14, 0
      %p55 = por %p53, %p54
      %p56 = scmp.ne.s32.totalorder %s48, %s50
      %p57 = scmp.eq.s32.totalorder %s19, 1
      %p58 = por %p56, %p57
      %p59 = scmp.ne.s32.totalorder %s50, %s51
      %p60 = scmp.eq.s32.totalorder %s19, 0
      %p61 = por %p59, %p60
      %p62 = scmp.ne.s32.totalorder %s50, %s51
      %p63 = scmp.eq.s32.totalorder %s20, 1
      %p64 = por %p62, %p63
      %p66 = scmp.ne.s32.totalorder %s51, %s65
      %p67 = scmp.eq.s32.totalorder %s20, 0
      %p68 = por %p66, %p67
      %s70 = sadd.s32 %s69, 1
      %p73 = scmp.eq.s32.totalorder %s14, 1
      %p74 = scmp.ne.s32.totalorder %s69, %s71
      %p75 = scmp.eq.s32.totalorder %s14, 0
      %p76 = por %p74, %p75
      %p77 = scmp.ne.s32.totalorder %s69, %s71
      %p78 = scmp.eq.s32.totalorder %s19, 1
      %p79 = por %p77, %p78
      %p80 = scmp.ne.s32.totalorder %s71, %s72
      %p81 = scmp.eq.s32.totalorder %s19, 0
      %p82 = por %p80, %p81
      %p83 = scmp.ne.s32.totalorder %s71, %s72
      %p84 = scmp.eq.s32.totalorder %s20, 1
      %p85 = por %p83, %p84
      %p87 = scmp.ne.s32.totalorder %s72, %s86
      %p88 = scmp.eq.s32.totalorder %s20, 0
      %p89 = por %p87, %p88
      %s91 = sadd.s32 %s90, 1
      %p94 = scmp.eq.s32.totalorder %s14, 1
      %p95 = scmp.ne.s32.totalorder %s90, %s92
      %p96 = scmp.eq.s32.totalorder %s14, 0
      %p97 = por %p95, %p96
      %p98 = scmp.ne.s32.totalorder %s90, %s92
      %p99 = scmp.eq.s32.totalorder %s19, 1
      %p100 = por %p98, %p99
      %p101 = scmp.ne.s32.totalorder %s92, %s93
      %p102 = scmp.eq.s32.totalorder %s19, 0
      %p103 = por %p101, %p102
      %p104 = scmp.ne.s32.totalorder %s92, %s93
      %p105 = scmp.eq.s32.totalorder %s20, 1
      %p106 = por %p104, %p105
      %p108 = scmp.ne.s32.totalorder %s93, %s107
      %p109 = scmp.eq.s32.totalorder %s20, 0
      %p110 = por %p108, %p109
      %s112 = sadd.s32 %s111, 1
      %p115 = scmp.eq.s32.totalorder %s14, 1
      %p116 = scmp.ne.s32.totalorder %s111, %s113
      %p117 = scmp.eq.s32.totalorder %s14, 0
      %p118 = por %p116, %p117
      %p119 = scmp.ne.s32.totalorder %s111, %s113
      %p120 = scmp.eq.s32.totalorder %s19, 1
      %p121 = por %p119, %p120
      %p122 = scmp.ne.s32.totalorder %s113, %s114
      %p123 = scmp.eq.s32.totalorder %s19, 0
      %p124 = por %p122, %p123
      %p125 = scmp.ne.s32.totalorder %s113, %s114
      %p126 = scmp.eq.s32.totalorder %s20, 1
      %p127 = por %p125, %p126
      %p129 = scmp.ne.s32.totalorder %s114, %s128
      %p130 = scmp.eq.s32.totalorder %s20, 0
      %p131 = por %p129, %p130
      %s132 = ssub.s32 %s14, %s21
      %p133 = scmp.eq.s32.totalorder %s132, 0
      %s135 = sadd.s32 %s134, 1
      %s136 = scalar_select %p133, %s134, %s135
      %p139 = pneg %p133
      %p140 = scmp.eq.s32.totalorder %s14, 1
      %p141 = por %p139, %p140
      %p142 = scmp.ne.s32.totalorder %s134, %s137
      %p143 = scmp.eq.s32.totalorder %s14, 0
      %p144 = por %p142, %p143
      %p145 = scmp.ne.s32.totalorder %s134, %s137
      %p146 = scmp.eq.s32.totalorder %s19, 1
      %p147 = por %p145, %p146
      %p148 = scmp.ne.s32.totalorder %s137, %s138
      %p149 = scmp.eq.s32.totalorder %s19, 0
      %p150 = por %p148, %p149
      %p151 = scmp.ne.s32.totalorder %s137, %s138
      %p152 = scmp.eq.s32.totalorder %s20, 1
      %p153 = por %p151, %p152
      %p155 = scmp.ne.s32.totalorder %s138, %s154
      %p156 = scmp.eq.s32.totalorder %s20, 0
      %p157 = por %p155, %p156
      %p158 = scmp.le.s32.totalorder 1, %s14
      %p159 = scmp.lt.s32.totalorder %s14, 3
      %p160 = pnand %p158, %p159
      %p161 = pneg %p160
      // Predicated region
      $region9: #{convnet3_forward.1} parent=5 // pred_check
        _
      $region10: #{convnet3_forward.1} parent=5 // pred_check_branch
        %163 = sbr.rel (%p160) target = $region12
      $region11: #{convnet3_forward.1} parent=5 // pred_region
        %s164 = ssub.s32 %s14, 1
        // Predicated region
        $region13: #{convnet3_forward.1} parent=11 // pred_check
          %p165 = pneg %p61
        $region14: #{convnet3_forward.1} parent=11 // pred_check_branch
          %167 = sbr.rel (%p165) target = $region16
        $region15: #{convnet3_forward.1} parent=11 // pred_region
          _
        $region16: #{convnet3_forward.1} parent=11 // pred_fallthru
          _
        // Predicated region
        $region17: #{convnet3_forward.1} parent=11 // pred_check
          %p168 = pneg %p82
        $region18: #{convnet3_forward.1} parent=11 // pred_check_branch
          %170 = sbr.rel (%p168) target = $region20
        $region19: #{convnet3_forward.1} parent=11 // pred_region
          _
        $region20: #{convnet3_forward.1} parent=11 // pred_fallthru
          _
        // Predicated region
        $region21: #{convnet3_forward.1} parent=11 // pred_check
          %p171 = pneg %p103
        $region22: #{convnet3_forward.1} parent=11 // pred_check_branch
          %173 = sbr.rel (%p171) target = $region24
        $region23: #{convnet3_forward.1} parent=11 // pred_region
          _
        $region24: #{convnet3_forward.1} parent=11 // pred_fallthru
          _
        // Predicated region
        $region25: #{convnet3_forward.1} parent=11 // pred_check
          %p174 = pneg %p124
        $region26: #{convnet3_forward.1} parent=11 // pred_check_branch
          %176 = sbr.rel (%p174) target = $region28
        $region27: #{convnet3_forward.1} parent=11 // pred_region
          _
        $region28: #{convnet3_forward.1} parent=11 // pred_fallthru
          _
      $region12: #{convnet3_forward.1} parent=5 // pred_fallthru
        _
      %p177 = scmp.lt.s32.totalorder %s14, 2
      // Predicated region
      $region29: #{convnet3_forward.1} parent=5 // pred_check
        %p178 = pneg %p177
      $region30: #{convnet3_forward.1} parent=5 // pred_check_branch
        %180 = sbr.rel (%p178) target = $region32
      $region31: #{convnet3_forward.1} parent=5 // pred_region
        // Predicated region
        $region33: #{convnet3_forward.1} parent=31 // pred_check
          %p181 = pneg %p34
        $region34: #{convnet3_forward.1} parent=31 // pred_check_branch
          %183 = sbr.rel (%p181) target = $region36
        $region35: #{convnet3_forward.1} parent=31 // pred_region
          %p184 = scmp.lt.s32.totalorder %s14, 1
          %s185 = scalar_select %p184, %s14, 1
          %s186 = smul.addr %s185, 32
          %s187 = smul.addr %s186, 8
          %s188 = scalar_lea.vmem %s0, %s187
        $region36: #{convnet3_forward.1} parent=31 // pred_fallthru
          _
      $region32: #{convnet3_forward.1} parent=5 // pred_fallthru
        _
      %p189 = scmp.le.s32.totalorder 1, %s14
      %p190 = scmp.lt.s32.totalorder %s14, 3
      %p191 = pnand %p189, %p190
      %p192 = pneg %p191
      // Predicated region
      $region37: #{convnet3_forward.1} parent=5 // pred_check
        _
      $region38: #{convnet3_forward.1} parent=5 // pred_check_branch
        %194 = sbr.rel (%p191) target = $region40
      $region39: #{convnet3_forward.1} parent=5 // pred_region
        %s195 = ssub.s32 %s14, 1
        %p196 = scmp.lt.s32.totalorder %s19, 1
        %s197 = scalar_select %p196, %s19, 1
        %s198 = smul.addr %s197, 32
        %s199 = smul.addr %s198, 8
        %s200 = scalar_lea.vmem %s0, %s199
        %p201 = pneg %p40
        %p202 = pneg %p37
        %p203 = pneg %p61
        %p204 = pneg %p58
        %p205 = pneg %p82
        %p206 = pneg %p79
        %p207 = pneg %p103
        %p208 = pneg %p100
        %p209 = pneg %p124
        %p210 = pneg %p121
        %p211 = pneg %p150
        %p212 = pneg %p147
        %s213 = sand.u32 %s137, 1
        %s214 = scalar_lea.sflag [#allocation3], %s213
        %s215 = sand.u32 %s137, 1
        %s216 = scalar_lea.vmem [#allocation2], %s215
        %p217 = scmp.lt.s32.totalorder %s19, 1
        %s218 = scalar_select %p217, %s19, 1
        %s219 = smul.addr %s218, 32
        %s220 = smul.addr %s219, 8
        %s221 = scalar_lea.vmem %s0, %s220
        %v222 = vld [vmem:[%s1] sm:$0xff]
        %v223 = vld [vmem:[%s1 + $0x8] sm:$0xff]
        %v224 = vld [vmem:[%s221] sm:$0xff]
        %v225 = vld [vmem:[%s221 + $0x8] sm:$0xff]
        %v226 = vld [vmem:[%s221 + $0x10] sm:$0xff]
        %v227 = vld [vmem:[%s221 + $0x18] sm:$0xff]
        %v228 = vld [vmem:[%s221 + $0x20] sm:$0xff]
        %v229 = vld [vmem:[%s221 + $0x28] sm:$0xff]
        %v230 = vld [vmem:[%s221 + $0x30] sm:$0xff]
        %v231 = vld [vmem:[%s221 + $0x38] sm:$0xff]
        %v232 = vld [vmem:[%s221 + $0x40] sm:$0xff]
        %v233 = vld [vmem:[%s221 + $0x48] sm:$0xff]
        %v234 = vld [vmem:[%s221 + $0x50] sm:$0xff]
        %v235 = vld [vmem:[%s221 + $0x58] sm:$0xff]
        %v236 = vld [vmem:[%s221 + $0x60] sm:$0xff]
        %v237 = vld [vmem:[%s221 + $0x68] sm:$0xff]
        %v238 = vld [vmem:[%s221 + $0x70] sm:$0xff]
        %v239 = vld [vmem:[%s221 + $0x78] sm:$0xff]
        %v240 = vld [vmem:[%s221 + $0x80] sm:$0xff]
        %v241 = vld [vmem:[%s221 + $0x88] sm:$0xff]
        %v242 = vld [vmem:[%s221 + $0x90] sm:$0xff]
        %v243 = vld [vmem:[%s221 + $0x98] sm:$0xff]
        %v244 = vld [vmem:[%s221 + $0xa0] sm:$0xff]
        %v245 = vld [vmem:[%s221 + $0xa8] sm:$0xff]
        %v246 = vld [vmem:[%s221 + $0xb0] sm:$0xff]
        %v247 = vld [vmem:[%s221 + $0xb8] sm:$0xff]
        %v248 = vld [vmem:[%s221 + $0xc0] sm:$0x7]
        %v249 = vld [vmem:[%s221 + $0xc8] sm:$0x7]
        %v250 = vld [vmem:[%s221 + $0xd0] sm:$0x7]
        %v251 = vld [vmem:[%s221 + $0xd8] sm:$0x7]
        %v252 = vld [vmem:[%s221 + $0xe0] sm:$0x7]
        %v253 = vld [vmem:[%s221 + $0xe8] sm:$0x7]
        %v254 = vld [vmem:[%s221 + $0xf0] sm:$0x7]
        %v255 = vld [vmem:[%s221 + $0xf8] sm:$0x7]
        %vm256 = vcmask 220160
        %v258 = vsel %vm256, %v222, 0
        %v261 = vsel %vm256, %v223, 0
        %vm263 = vcmask 1042432
        %v265 = vsel %vm263, %v248, 0
        %v268 = vsel %vm263, %v249, 0
        %v271 = vsel %vm263, %v250, 0
        %v274 = vsel %vm263, %v251, 0
        %v277 = vsel %vm263, %v252, 0
        %v280 = vsel %vm263, %v253, 0
        %v283 = vsel %vm263, %v254, 0
        %v286 = vsel %vm263, %v255, 0
        %288 = vmatprep.subr.mxu0 0.0
        %289 = vmatpush1.msra.mxu0 0.0
        %290 = vmatprep.subr.mxu0 0.0
        %291 = vmatpush1.msra.mxu0 0.0
        %292 = vmatprep.subr.mxu0 0.0
        %293 = vmatpush1.msra.mxu0 0.0
        %294 = vmatprep.subr.mxu0 0.0
        %295 = vmatpush1.msra.mxu0 0.0
        %296 = vmatprep.subr.mxu0 0.0
        %297 = vmatpush1.msra.mxu0 0.0
        %298 = vmatprep.subr.mxu0 0.0
        %299 = vmatpush1.msra.mxu0 0.0
        %300 = vmatprep.subr.mxu0 0.0
        %301 = vmatpush1.msra.mxu0 0.0
        %302 = vmatprep.subr.mxu0 0.0
        %303 = vmatpush1.msra.mxu0 0.0
        %304 = vmatprep.subr.mxu0 0.0
        %305 = vmatpush1.msra.mxu0 0.0
        %306 = vmatprep.subr.mxu0 0.0
        %307 = vmatpush1.msra.mxu0 0.0
        %308 = vmatprep.subr.mxu0 0.0
        %309 = vmatpush1.msra.mxu0 0.0
        %310 = vmatprep.subr.mxu0 0.0
        %311 = vmatpush1.msra.mxu0 0.0
        %312 = vmatprep.subr.mxu0 %v268
        %313 = vmatpush1.msra.mxu0 %v265
        %314 = vmatprep.subr.mxu0 %v241
        %315 = vmatpush1.msra.mxu0 %v240
        %316 = vmatprep.subr.mxu0 %v233
        %317 = vmatpush1.msra.mxu0 %v232
        %318 = vmatprep.subr.mxu0 %v225
        %319 = vmatpush1.msra.mxu0 %v224
        %320 = vmatprep.subr.mxu0 0.0
        %321 = vmatpush2.msra.mxu0 0.0
        %322 = vmatprep.subr.mxu0 0.0
        %323 = vmatpush2.msra.mxu0 0.0
        %324 = vmatprep.subr.mxu0 0.0
        %325 = vmatpush2.msra.mxu0 0.0
        %326 = vmatprep.subr.mxu0 0.0
        %327 = vmatpush2.msra.mxu0 0.0
        %328 = vmatprep.subr.mxu0 0.0
        %329 = vmatpush2.msra.mxu0 0.0
        %330 = vmatprep.subr.mxu0 0.0
        %331 = vmatpush2.msra.mxu0 0.0
        %332 = vmatprep.subr.mxu0 0.0
        %333 = vmatpush2.msra.mxu0 0.0
        %334 = vmatprep.subr.mxu0 0.0
        %335 = vmatpush2.msra.mxu0 0.0
        %336 = vmatprep.subr.mxu0 0.0
        %337 = vmatpush2.msra.mxu0 0.0
        %338 = vmatprep.subr.mxu0 0.0
        %339 = vmatpush2.msra.mxu0 0.0
        %340 = vmatprep.subr.mxu0 0.0
        %341 = vmatpush2.msra.mxu0 0.0
        %342 = vmatprep.subr.mxu0 0.0
        %343 = vmatpush2.msra.mxu0 0.0
        %344 = vmatprep.subr.mxu0 0.0
        %345 = vmatpush2.msra.mxu0 0.0
        %346 = vmatprep.subr.mxu0 0.0
        %347 = vmatpush2.msra.mxu0 0.0
        %348 = vmatprep.subr.mxu0 0.0
        %349 = vmatpush2.msra.mxu0 0.0
        %350 = vmatprep.subr.mxu0 0.0
        %351 = vmatpush2.msra.mxu0 0.0
        %352 = vmatprep.mubr.f32.mxu0 0.0
        %353 = vmatmul.mubr.f32.gmra.mxu0 %v258
        %v354 = vpop.f32.mrf.mxu0
        %v355 = vadd.f32 0.0, %v354
        %v356 = vpop.f32.mrf.mxu0
        %v357 = vadd.f32 0.0, %v356
        %358 = vmatprep.mubr.f32.mxu0 0.0
        %359 = vmatmul.mubr.f32.gmra.mxu0 %v261
        %v360 = vpop.f32.mrf.mxu0
        %v361 = vadd.f32 0.0, %v360
        %v362 = vpop.f32.mrf.mxu0
        %v363 = vadd.f32 0.0, %v362
        %364 = vdwg.mxu0
        %365 = vmatprep.subr.mxu0 0.0
        %366 = vmatpush1.msra.mxu0 0.0
        %367 = vmatprep.subr.mxu0 0.0
        %368 = vmatpush1.msra.mxu0 0.0
        %369 = vmatprep.subr.mxu0 0.0
        %370 = vmatpush1.msra.mxu0 0.0
        %371 = vmatprep.subr.mxu0 0.0
        %372 = vmatpush1.msra.mxu0 0.0
        %373 = vmatprep.subr.mxu0 0.0
        %374 = vmatpush1.msra.mxu0 0.0
        %375 = vmatprep.subr.mxu0 0.0
        %376 = vmatpush1.msra.mxu0 0.0
        %377 = vmatprep.subr.mxu0 0.0
        %378 = vmatpush1.msra.mxu0 0.0
        %379 = vmatprep.subr.mxu0 0.0
        %380 = vmatpush1.msra.mxu0 0.0
        %381 = vmatprep.subr.mxu0 0.0
        %382 = vmatpush1.msra.mxu0 0.0
        %383 = vmatprep.subr.mxu0 0.0
        %384 = vmatpush1.msra.mxu0 0.0
        %385 = vmatprep.subr.mxu0 0.0
        %386 = vmatpush1.msra.mxu0 0.0
        %387 = vmatprep.subr.mxu0 0.0
        %388 = vmatpush1.msra.mxu0 0.0
        %389 = vmatprep.subr.mxu0 %v274
        %390 = vmatpush1.msra.mxu0 %v271
        %391 = vmatprep.subr.mxu0 %v243
        %392 = vmatpush1.msra.mxu0 %v242
        %393 = vmatprep.subr.mxu0 %v235
        %394 = vmatpush1.msra.mxu0 %v234
        %395 = vmatprep.subr.mxu0 %v227
        %396 = vmatpush1.msra.mxu0 %v226
        %397 = vmatprep.subr.mxu0 0.0
        %398 = vmatpush2.msra.mxu0 0.0
        %399 = vmatprep.subr.mxu0 0.0
        %400 = vmatpush2.msra.mxu0 0.0
        %401 = vmatprep.subr.mxu0 0.0
        %402 = vmatpush2.msra.mxu0 0.0
        %403 = vmatprep.subr.mxu0 0.0
        %404 = vmatpush2.msra.mxu0 0.0
        %405 = vmatprep.subr.mxu0 0.0
        %406 = vmatpush2.msra.mxu0 0.0
        %407 = vmatprep.subr.mxu0 0.0
        %408 = vmatpush2.msra.mxu0 0.0
        %409 = vmatprep.subr.mxu0 0.0
        %410 = vmatpush2.msra.mxu0 0.0
        %411 = vmatprep.subr.mxu0 0.0
        %412 = vmatpush2.msra.mxu0 0.0
        %413 = vmatprep.subr.mxu0 0.0
        %414 = vmatpush2.msra.mxu0 0.0
        %415 = vmatprep.subr.mxu0 0.0
        %416 = vmatpush2.msra.mxu0 0.0
        %417 = vmatprep.subr.mxu0 0.0
        %418 = vmatpush2.msra.mxu0 0.0
        %419 = vmatprep.subr.mxu0 0.0
        %420 = vmatpush2.msra.mxu0 0.0
        %421 = vmatprep.subr.mxu0 0.0
        %422 = vmatpush2.msra.mxu0 0.0
        %423 = vmatprep.subr.mxu0 0.0
        %424 = vmatpush2.msra.mxu0 0.0
        %425 = vmatprep.subr.mxu0 0.0
        %426 = vmatpush2.msra.mxu0 0.0
        %427 = vmatprep.subr.mxu0 0.0
        %428 = vmatpush2.msra.mxu0 0.0
        %429 = vmatprep.mubr.f32.mxu0 0.0
        %430 = vmatmul.mubr.f32.gmra.mxu0 %v258
        %v431 = vpop.f32.mrf.mxu0
        %v432 = vadd.f32 0.0, %v431
        %v433 = vpop.f32.mrf.mxu0
        %v434 = vadd.f32 0.0, %v433
        %435 = vmatprep.mubr.f32.mxu0 0.0
        %436 = vmatmul.mubr.f32.gmra.mxu0 %v261
        %v437 = vpop.f32.mrf.mxu0
        %v438 = vadd.f32 0.0, %v437
        %v439 = vpop.f32.mrf.mxu0
        %v440 = vadd.f32 0.0, %v439
        %441 = vdwg.mxu0
        %442 = vmatprep.subr.mxu0 0.0
        %443 = vmatpush1.msra.mxu0 0.0
        %444 = vmatprep.subr.mxu0 0.0
        %445 = vmatpush1.msra.mxu0 0.0
        %446 = vmatprep.subr.mxu0 0.0
        %447 = vmatpush1.msra.mxu0 0.0
        %448 = vmatprep.subr.mxu0 0.0
        %449 = vmatpush1.msra.mxu0 0.0
        %450 = vmatprep.subr.mxu0 0.0
        %451 = vmatpush1.msra.mxu0 0.0
        %452 = vmatprep.subr.mxu0 0.0
        %453 = vmatpush1.msra.mxu0 0.0
        %454 = vmatprep.subr.mxu0 0.0
        %455 = vmatpush1.msra.mxu0 0.0
        %456 = vmatprep.subr.mxu0 0.0
        %457 = vmatpush1.msra.mxu0 0.0
        %458 = vmatprep.subr.mxu0 0.0
        %459 = vmatpush1.msra.mxu0 0.0
        %460 = vmatprep.subr.mxu0 0.0
        %461 = vmatpush1.msra.mxu0 0.0
        %462 = vmatprep.subr.mxu0 0.0
        %463 = vmatpush1.msra.mxu0 0.0
        %464 = vmatprep.subr.mxu0 0.0
        %465 = vmatpush1.msra.mxu0 0.0
        %466 = vmatprep.subr.mxu0 %v280
        %467 = vmatpush1.msra.mxu0 %v277
        %468 = vmatprep.subr.mxu0 %v245
        %469 = vmatpush1.msra.mxu0 %v244
        %470 = vmatprep.subr.mxu0 %v237
        %471 = vmatpush1.msra.mxu0 %v236
        %472 = vmatprep.subr.mxu0 %v229
        %473 = vmatpush1.msra.mxu0 %v228
        %474 = vmatprep.subr.mxu0 0.0
        %475 = vmatpush2.msra.mxu0 0.0
        %476 = vmatprep.subr.mxu0 0.0
        %477 = vmatpush2.msra.mxu0 0.0
        %478 = vmatprep.subr.mxu0 0.0
        %479 = vmatpush2.msra.mxu0 0.0
        %480 = vmatprep.subr.mxu0 0.0
        %481 = vmatpush2.msra.mxu0 0.0
        %482 = vmatprep.subr.mxu0 0.0
        %483 = vmatpush2.msra.mxu0 0.0
        %484 = vmatprep.subr.mxu0 0.0
        %485 = vmatpush2.msra.mxu0 0.0
        %486 = vmatprep.subr.mxu0 0.0
        %487 = vmatpush2.msra.mxu0 0.0
        %488 = vmatprep.subr.mxu0 0.0
        %489 = vmatpush2.msra.mxu0 0.0
        %490 = vmatprep.subr.mxu0 0.0
        %491 = vmatpush2.msra.mxu0 0.0
        %492 = vmatprep.subr.mxu0 0.0
        %493 = vmatpush2.msra.mxu0 0.0
        %494 = vmatprep.subr.mxu0 0.0
        %495 = vmatpush2.msra.mxu0 0.0
        %496 = vmatprep.subr.mxu0 0.0
        %497 = vmatpush2.msra.mxu0 0.0
        %498 = vmatprep.subr.mxu0 0.0
        %499 = vmatpush2.msra.mxu0 0.0
        %500 = vmatprep.subr.mxu0 0.0
        %501 = vmatpush2.msra.mxu0 0.0
        %502 = vmatprep.subr.mxu0 0.0
        %503 = vmatpush2.msra.mxu0 0.0
        %504 = vmatprep.subr.mxu0 0.0
        %505 = vmatpush2.msra.mxu0 0.0
        %506 = vmatprep.mubr.f32.mxu0 0.0
        %507 = vmatmul.mubr.f32.gmra.mxu0 %v258
        %v508 = vpop.f32.mrf.mxu0
        %v509 = vadd.f32 0.0, %v508
        %v510 = vpop.f32.mrf.mxu0
        %v511 = vadd.f32 0.0, %v510
        %512 = vmatprep.mubr.f32.mxu0 0.0
        %513 = vmatmul.mubr.f32.gmra.mxu0 %v261
        %v514 = vpop.f32.mrf.mxu0
        %v515 = vadd.f32 0.0, %v514
        %v516 = vpop.f32.mrf.mxu0
        %v517 = vadd.f32 0.0, %v516
        %518 = vdwg.mxu0
        %519 = vmatprep.subr.mxu0 0.0
        %520 = vmatpush1.msra.mxu0 0.0
        %521 = vmatprep.subr.mxu0 0.0
        %522 = vmatpush1.msra.mxu0 0.0
        %523 = vmatprep.subr.mxu0 0.0
        %524 = vmatpush1.msra.mxu0 0.0
        %525 = vmatprep.subr.mxu0 0.0
        %526 = vmatpush1.msra.mxu0 0.0
        %527 = vmatprep.subr.mxu0 0.0
        %528 = vmatpush1.msra.mxu0 0.0
        %529 = vmatprep.subr.mxu0 0.0
        %530 = vmatpush1.msra.mxu0 0.0
        %531 = vmatprep.subr.mxu0 0.0
        %532 = vmatpush1.msra.mxu0 0.0
        %533 = vmatprep.subr.mxu0 0.0
        %534 = vmatpush1.msra.mxu0 0.0
        %535 = vmatprep.subr.mxu0 0.0
        %536 = vmatpush1.msra.mxu0 0.0
        %537 = vmatprep.subr.mxu0 0.0
        %538 = vmatpush1.msra.mxu0 0.0
        %539 = vmatprep.subr.mxu0 0.0
        %540 = vmatpush1.msra.mxu0 0.0
        %541 = vmatprep.subr.mxu0 0.0
        %542 = vmatpush1.msra.mxu0 0.0
        %543 = vmatprep.subr.mxu0 %v286
        %544 = vmatpush1.msra.mxu0 %v283
        %545 = vmatprep.subr.mxu0 %v247
        %546 = vmatpush1.msra.mxu0 %v246
        %547 = vmatprep.subr.mxu0 %v239
        %548 = vmatpush1.msra.mxu0 %v238
        %549 = vmatprep.subr.mxu0 %v231
        %550 = vmatpush1.msra.mxu0 %v230
        %551 = vmatprep.subr.mxu0 0.0
        %552 = vmatpush2.msra.mxu0 0.0
        %553 = vmatprep.subr.mxu0 0.0
        %554 = vmatpush2.msra.mxu0 0.0
        %555 = vmatprep.subr.mxu0 0.0
        %556 = vmatpush2.msra.mxu0 0.0
        %557 = vmatprep.subr.mxu0 0.0
        %558 = vmatpush2.msra.mxu0 0.0
        %559 = vmatprep.subr.mxu0 0.0
        %560 = vmatpush2.msra.mxu0 0.0
        %561 = vmatprep.subr.mxu0 0.0
        %562 = vmatpush2.msra.mxu0 0.0
        %563 = vmatprep.subr.mxu0 0.0
        %564 = vmatpush2.msra.mxu0 0.0
        %565 = vmatprep.subr.mxu0 0.0
        %566 = vmatpush2.msra.mxu0 0.0
        %567 = vmatprep.subr.mxu0 0.0
        %568 = vmatpush2.msra.mxu0 0.0
        %569 = vmatprep.subr.mxu0 0.0
        %570 = vmatpush2.msra.mxu0 0.0
        %571 = vmatprep.subr.mxu0 0.0
        %572 = vmatpush2.msra.mxu0 0.0
        %573 = vmatprep.subr.mxu0 0.0
        %574 = vmatpush2.msra.mxu0 0.0
        %575 = vmatprep.subr.mxu0 0.0
        %576 = vmatpush2.msra.mxu0 0.0
        %577 = vmatprep.subr.mxu0 0.0
        %578 = vmatpush2.msra.mxu0 0.0
        %579 = vmatprep.subr.mxu0 0.0
        %580 = vmatpush2.msra.mxu0 0.0
        %581 = vmatprep.subr.mxu0 0.0
        %582 = vmatpush2.msra.mxu0 0.0
        %583 = vmatprep.mubr.f32.mxu0 0.0
        %584 = vmatmul.mubr.f32.gmra.mxu0 %v258
        %v585 = vpop.f32.mrf.mxu0
        %v586 = vadd.f32 0.0, %v585
        %v587 = vpop.f32.mrf.mxu0
        %v588 = vadd.f32 0.0, %v587
        %589 = vmatprep.mubr.f32.mxu0 0.0
        %590 = vmatmul.mubr.f32.gmra.mxu0 %v261
        %v591 = vpop.f32.mrf.mxu0
        %v592 = vadd.f32 0.0, %v591
        %v593 = vpop.f32.mrf.mxu0
        %v594 = vadd.f32 0.0, %v593
        %595 = vdwg.mxu0
        %v596 = vmax.f32 %v355, %v432
        %v597 = vmax.f32 %v357, %v434
        %v598 = vmax.f32 %v361, %v438
        %v599 = vmax.f32 %v363, %v440
        %v600 = vmax.f32 %v509, %v586
        %v601 = vmax.f32 %v511, %v588
        %v602 = vmax.f32 %v515, %v592
        %v603 = vmax.f32 %v517, %v594
        %v604 = vmax.f32 %v596, %v600
        %v605 = vmax.f32 %v597, %v601
        %v606 = vmax.f32 %v598, %v602
        %v607 = vmax.f32 %v599, %v603
        %v608 = vld [vmem:[%s2] sm:$0xff]
        %v609 = vld [vmem:[%s2 + $0x8] sm:$0xff]
        %611 = vset.pattern.permute.xlu0 0
        %612 = vperm.xlu0 %611, %v608
        %v613 = vpop.permute.xlu0 %612
        %616 = vset.pattern.permute.xlu0 0
        %617 = vperm.xlu0 %616, %v609
        %v618 = vpop.permute.xlu0 %617
        %v620 = vadd.f32 %v604, %v613
        %v621 = vadd.f32 %v605, %v613
        %v622 = vadd.f32 %v606, %v618
        %v623 = vadd.f32 %v607, %v618
        %v624 = vmax.f32 %v620, 0.0
        %v625 = vmax.f32 %v621, 0.0
        %v626 = vmax.f32 %v622, 0.0
        %v627 = vmax.f32 %v623, 0.0
        %v628 = vld [vmem:[%s4] sm:$0x1]
        %v629 = vld [vmem:[%s3] sm:$0xff]
        %v630 = vld [vmem:[%s3 + $0x8] sm:$0xff]
        %v631 = vld [vmem:[%s3 + $0x10] sm:$0xff]
        %v632 = vld [vmem:[%s3 + $0x18] sm:$0xff]
        %v633 = vld [vmem:[%s3 + $0x20] sm:$0xff]
        %v634 = vld [vmem:[%s3 + $0x28] sm:$0xff]
        %v635 = vld [vmem:[%s3 + $0x30] sm:$0xff]
        %v636 = vld [vmem:[%s3 + $0x38] sm:$0xff]
        %v637 = vld [vmem:[%s3 + $0x40] sm:$0xff]
        %v638 = vld [vmem:[%s3 + $0x48] sm:$0xff]
        %v639 = vld [vmem:[%s3 + $0x50] sm:$0xff]
        %v640 = vld [vmem:[%s3 + $0x58] sm:$0xff]
        %v641 = vld [vmem:[%s3 + $0x60] sm:$0xff]
        %v642 = vld [vmem:[%s3 + $0x68] sm:$0xff]
        %v643 = vld [vmem:[%s3 + $0x70] sm:$0xff]
        %v644 = vld [vmem:[%s3 + $0x78] sm:$0xff]
        %v645 = vld [vmem:[%s3 + $0x80] sm:$0xff]
        %v646 = vld [vmem:[%s3 + $0x88] sm:$0xff]
        %v647 = vld [vmem:[%s3 + $0x90] sm:$0xff]
        %v648 = vld [vmem:[%s3 + $0x98] sm:$0xff]
        %v649 = vld [vmem:[%s3 + $0xa0] sm:$0xff]
        %v650 = vld [vmem:[%s3 + $0xa8] sm:$0xff]
        %v651 = vld [vmem:[%s3 + $0xb0] sm:$0xff]
        %v652 = vld [vmem:[%s3 + $0xb8] sm:$0xff]
        %v653 = vld [vmem:[%s3 + $0xc0] sm:$0xff]
        %v654 = vld [vmem:[%s3 + $0xc8] sm:$0xff]
        %v655 = vld [vmem:[%s3 + $0xd0] sm:$0xff]
        %v656 = vld [vmem:[%s3 + $0xd8] sm:$0xff]
        %v657 = vld [vmem:[%s3 + $0xe0] sm:$0xff]
        %v658 = vld [vmem:[%s3 + $0xe8] sm:$0xff]
        %v659 = vld [vmem:[%s3 + $0xf0] sm:$0xff]
        %v660 = vld [vmem:[%s3 + $0xf8] sm:$0xff]
        %661 = vmatprep.subr.mxu0 0.0
        %662 = vmatpush1.msra.mxu0 %v644
        %663 = vmatprep.subr.mxu0 0.0
        %664 = vmatpush1.msra.mxu0 %v643
        %665 = vmatprep.subr.mxu0 0.0
        %666 = vmatpush1.msra.mxu0 %v642
        %667 = vmatprep.subr.mxu0 0.0
        %668 = vmatpush1.msra.mxu0 %v641
        %669 = vmatprep.subr.mxu0 0.0
        %670 = vmatpush1.msra.mxu0 %v640
        %671 = vmatprep.subr.mxu0 0.0
        %672 = vmatpush1.msra.mxu0 %v639
        %673 = vmatprep.subr.mxu0 0.0
        %674 = vmatpush1.msra.mxu0 %v638
        %675 = vmatprep.subr.mxu0 0.0
        %676 = vmatpush1.msra.mxu0 %v637
        %677 = vmatprep.subr.mxu0 0.0
        %678 = vmatpush1.msra.mxu0 %v636
        %679 = vmatprep.subr.mxu0 0.0
        %680 = vmatpush1.msra.mxu0 %v635
        %681 = vmatprep.subr.mxu0 0.0
        %682 = vmatpush1.msra.mxu0 %v634
        %683 = vmatprep.subr.mxu0 0.0
        %684 = vmatpush1.msra.mxu0 %v633
        %685 = vmatprep.subr.mxu0 0.0
        %686 = vmatpush1.msra.mxu0 %v632
        %687 = vmatprep.subr.mxu0 0.0
        %688 = vmatpush1.msra.mxu0 %v631
        %689 = vmatprep.subr.mxu0 0.0
        %690 = vmatpush1.msra.mxu0 %v630
        %691 = vmatprep.subr.mxu0 0.0
        %692 = vmatpush1.msra.mxu0 %v629
        %693 = vmatprep.subr.mxu0 0.0
        %694 = vmatpush2.msra.mxu0 %v660
        %695 = vmatprep.subr.mxu0 0.0
        %696 = vmatpush2.msra.mxu0 %v659
        %697 = vmatprep.subr.mxu0 0.0
        %698 = vmatpush2.msra.mxu0 %v658
        %699 = vmatprep.subr.mxu0 0.0
        %700 = vmatpush2.msra.mxu0 %v657
        %701 = vmatprep.subr.mxu0 0.0
        %702 = vmatpush2.msra.mxu0 %v656
        %703 = vmatprep.subr.mxu0 0.0
        %704 = vmatpush2.msra.mxu0 %v655
        %705 = vmatprep.subr.mxu0 0.0
        %706 = vmatpush2.msra.mxu0 %v654
        %707 = vmatprep.subr.mxu0 0.0
        %708 = vmatpush2.msra.mxu0 %v653
        %709 = vmatprep.subr.mxu0 0.0
        %710 = vmatpush2.msra.mxu0 %v652
        %711 = vmatprep.subr.mxu0 0.0
        %712 = vmatpush2.msra.mxu0 %v651
        %713 = vmatprep.subr.mxu0 0.0
        %714 = vmatpush2.msra.mxu0 %v650
        %715 = vmatprep.subr.mxu0 0.0
        %716 = vmatpush2.msra.mxu0 %v649
        %717 = vmatprep.subr.mxu0 0.0
        %718 = vmatpush2.msra.mxu0 %v648
        %719 = vmatprep.subr.mxu0 0.0
        %720 = vmatpush2.msra.mxu0 %v647
        %721 = vmatprep.subr.mxu0 0.0
        %722 = vmatpush2.msra.mxu0 %v646
        %723 = vmatprep.subr.mxu0 0.0
        %724 = vmatpush2.msra.mxu0 %v645
        %725 = vmatprep.mubr.f32.mxu0 %v625
        %726 = vmatmul.mubr.f32.gmra.mxu0 %v624
        %v727 = vpop.f32.mrf.mxu0
        %v728 = vadd.f32 0.0, %v727
        %v729 = vpop.f32.mrf.mxu0
        %730 = vdwg.mxu0
        %v731 = vadd.f32 %v628, %v728
        %s732 = scalar_lea.vmem %s3, 256
        %v733 = vld [vmem:[%s732] sm:$0xff]
        %v734 = vld [vmem:[%s732 + $0x8] sm:$0xff]
        %v735 = vld [vmem:[%s732 + $0x10] sm:$0xff]
        %v736 = vld [vmem:[%s732 + $0x18] sm:$0xff]
        %v737 = vld [vmem:[%s732 + $0x20] sm:$0xff]
        %v738 = vld [vmem:[%s732 + $0x28] sm:$0xff]
        %v739 = vld [vmem:[%s732 + $0x30] sm:$0xff]
        %v740 = vld [vmem:[%s732 + $0x38] sm:$0xff]
        %v741 = vld [vmem:[%s732 + $0x40] sm:$0xff]
        %v742 = vld [vmem:[%s732 + $0x48] sm:$0xff]
        %v743 = vld [vmem:[%s732 + $0x50] sm:$0xff]
        %v744 = vld [vmem:[%s732 + $0x58] sm:$0xff]
        %v745 = vld [vmem:[%s732 + $0x60] sm:$0xff]
        %v746 = vld [vmem:[%s732 + $0x68] sm:$0xff]
        %v747 = vld [vmem:[%s732 + $0x70] sm:$0xff]
        %v748 = vld [vmem:[%s732 + $0x78] sm:$0xff]
        %v749 = vld [vmem:[%s732 + $0x80] sm:$0xff]
        %v750 = vld [vmem:[%s732 + $0x88] sm:$0xff]
        %v751 = vld [vmem:[%s732 + $0x90] sm:$0xff]
        %v752 = vld [vmem:[%s732 + $0x98] sm:$0xff]
        %v753 = vld [vmem:[%s732 + $0xa0] sm:$0xff]
        %v754 = vld [vmem:[%s732 + $0xa8] sm:$0xff]
        %v755 = vld [vmem:[%s732 + $0xb0] sm:$0xff]
        %v756 = vld [vmem:[%s732 + $0xb8] sm:$0xff]
        %v757 = vld [vmem:[%s732 + $0xc0] sm:$0xff]
        %v758 = vld [vmem:[%s732 + $0xc8] sm:$0xff]
        %v759 = vld [vmem:[%s732 + $0xd0] sm:$0xff]
        %v760 = vld [vmem:[%s732 + $0xd8] sm:$0xff]
        %v761 = vld [vmem:[%s732 + $0xe0] sm:$0xff]
        %v762 = vld [vmem:[%s732 + $0xe8] sm:$0xff]
        %v763 = vld [vmem:[%s732 + $0xf0] sm:$0xff]
        %v764 = vld [vmem:[%s732 + $0xf8] sm:$0xff]
        %v767 = vrot.slane %v624, 1
        %v768 = vrot.slane %v625, 1
        %771 = vmatprep.subr.mxu0 0.0
        %772 = vmatpush1.msra.mxu0 %v748
        %773 = vmatprep.subr.mxu0 0.0
        %774 = vmatpush1.msra.mxu0 %v747
        %775 = vmatprep.subr.mxu0 0.0
        %776 = vmatpush1.msra.mxu0 %v746
        %777 = vmatprep.subr.mxu0 0.0
        %778 = vmatpush1.msra.mxu0 %v745
        %779 = vmatprep.subr.mxu0 0.0
        %780 = vmatpush1.msra.mxu0 %v744
        %781 = vmatprep.subr.mxu0 0.0
        %782 = vmatpush1.msra.mxu0 %v743
        %783 = vmatprep.subr.mxu0 0.0
        %784 = vmatpush1.msra.mxu0 %v742
        %785 = vmatprep.subr.mxu0 0.0
        %786 = vmatpush1.msra.mxu0 %v741
        %787 = vmatprep.subr.mxu0 0.0
        %788 = vmatpush1.msra.mxu0 %v740
        %789 = vmatprep.subr.mxu0 0.0
        %790 = vmatpush1.msra.mxu0 %v739
        %791 = vmatprep.subr.mxu0 0.0
        %792 = vmatpush1.msra.mxu0 %v738
        %793 = vmatprep.subr.mxu0 0.0
        %794 = vmatpush1.msra.mxu0 %v737
        %795 = vmatprep.subr.mxu0 0.0
        %796 = vmatpush1.msra.mxu0 %v736
        %797 = vmatprep.subr.mxu0 0.0
        %798 = vmatpush1.msra.mxu0 %v735
        %799 = vmatprep.subr.mxu0 0.0
        %800 = vmatpush1.msra.mxu0 %v734
        %801 = vmatprep.subr.mxu0 0.0
        %802 = vmatpush1.msra.mxu0 %v733
        %803 = vmatprep.subr.mxu0 0.0
        %804 = vmatpush2.msra.mxu0 %v764
        %805 = vmatprep.subr.mxu0 0.0
        %806 = vmatpush2.msra.mxu0 %v763
        %807 = vmatprep.subr.mxu0 0.0
        %808 = vmatpush2.msra.mxu0 %v762
        %809 = vmatprep.subr.mxu0 0.0
        %810 = vmatpush2.msra.mxu0 %v761
        %811 = vmatprep.subr.mxu0 0.0
        %812 = vmatpush2.msra.mxu0 %v760
        %813 = vmatprep.subr.mxu0 0.0
        %814 = vmatpush2.msra.mxu0 %v759
        %815 = vmatprep.subr.mxu0 0.0
        %816 = vmatpush2.msra.mxu0 %v758
        %817 = vmatprep.subr.mxu0 0.0
        %818 = vmatpush2.msra.mxu0 %v757
        %819 = vmatprep.subr.mxu0 0.0
        %820 = vmatpush2.msra.mxu0 %v756
        %821 = vmatprep.subr.mxu0 0.0
        %822 = vmatpush2.msra.mxu0 %v755
        %823 = vmatprep.subr.mxu0 0.0
        %824 = vmatpush2.msra.mxu0 %v754
        %825 = vmatprep.subr.mxu0 0.0
        %826 = vmatpush2.msra.mxu0 %v753
        %827 = vmatprep.subr.mxu0 0.0
        %828 = vmatpush2.msra.mxu0 %v752
        %829 = vmatprep.subr.mxu0 0.0
        %830 = vmatpush2.msra.mxu0 %v751
        %831 = vmatprep.subr.mxu0 0.0
        %832 = vmatpush2.msra.mxu0 %v750
        %833 = vmatprep.subr.mxu0 0.0
        %834 = vmatpush2.msra.mxu0 %v749
        %835 = vmatprep.mubr.f32.mxu0 %v768
        %836 = vmatmul.mubr.f32.gmra.mxu0 %v767
        %v837 = vpop.f32.mrf.mxu0
        %v838 = vadd.f32 0.0, %v837
        %v839 = vpop.f32.mrf.mxu0
        %840 = vdwg.mxu0
        %v841 = vadd.f32 %v731, %v838
        %s842 = scalar_lea.vmem %s3, 512
        %v843 = vld [vmem:[%s842] sm:$0xff]
        %v844 = vld [vmem:[%s842 + $0x8] sm:$0xff]
        %v845 = vld [vmem:[%s842 + $0x10] sm:$0xff]
        %v846 = vld [vmem:[%s842 + $0x18] sm:$0xff]
        %v847 = vld [vmem:[%s842 + $0x20] sm:$0xff]
        %v848 = vld [vmem:[%s842 + $0x28] sm:$0xff]
        %v849 = vld [vmem:[%s842 + $0x30] sm:$0xff]
        %v850 = vld [vmem:[%s842 + $0x38] sm:$0xff]
        %v851 = vld [vmem:[%s842 + $0x40] sm:$0xff]
        %v852 = vld [vmem:[%s842 + $0x48] sm:$0xff]
        %v853 = vld [vmem:[%s842 + $0x50] sm:$0xff]
        %v854 = vld [vmem:[%s842 + $0x58] sm:$0xff]
        %v855 = vld [vmem:[%s842 + $0x60] sm:$0xff]
        %v856 = vld [vmem:[%s842 + $0x68] sm:$0xff]
        %v857 = vld [vmem:[%s842 + $0x70] sm:$0xff]
        %v858 = vld [vmem:[%s842 + $0x78] sm:$0xff]
        %v859 = vld [vmem:[%s842 + $0x80] sm:$0xff]
        %v860 = vld [vmem:[%s842 + $0x88] sm:$0xff]
        %v861 = vld [vmem:[%s842 + $0x90] sm:$0xff]
        %v862 = vld [vmem:[%s842 + $0x98] sm:$0xff]
        %v863 = vld [vmem:[%s842 + $0xa0] sm:$0xff]
        %v864 = vld [vmem:[%s842 + $0xa8] sm:$0xff]
        %v865 = vld [vmem:[%s842 + $0xb0] sm:$0xff]
        %v866 = vld [vmem:[%s842 + $0xb8] sm:$0xff]
        %v867 = vld [vmem:[%s842 + $0xc0] sm:$0xff]
        %v868 = vld [vmem:[%s842 + $0xc8] sm:$0xff]
        %v869 = vld [vmem:[%s842 + $0xd0] sm:$0xff]
        %v870 = vld [vmem:[%s842 + $0xd8] sm:$0xff]
        %v871 = vld [vmem:[%s842 + $0xe0] sm:$0xff]
        %v872 = vld [vmem:[%s842 + $0xe8] sm:$0xff]
        %v873 = vld [vmem:[%s842 + $0xf0] sm:$0xff]
        %v874 = vld [vmem:[%s842 + $0xf8] sm:$0xff]
        %v875 = vrot.slane %v624, 2
        %v876 = vrot.slane %v625, 2
        %879 = vmatprep.subr.mxu0 0.0
        %880 = vmatpush1.msra.mxu0 %v858
        %881 = vmatprep.subr.mxu0 0.0
        %882 = vmatpush1.msra.mxu0 %v857
        %883 = vmatprep.subr.mxu0 0.0
        %884 = vmatpush1.msra.mxu0 %v856
        %885 = vmatprep.subr.mxu0 0.0
        %886 = vmatpush1.msra.mxu0 %v855
        %887 = vmatprep.subr.mxu0 0.0
        %888 = vmatpush1.msra.mxu0 %v854
        %889 = vmatprep.subr.mxu0 0.0
        %890 = vmatpush1.msra.mxu0 %v853
        %891 = vmatprep.subr.mxu0 0.0
        %892 = vmatpush1.msra.mxu0 %v852
        %893 = vmatprep.subr.mxu0 0.0
        %894 = vmatpush1.msra.mxu0 %v851
        %895 = vmatprep.subr.mxu0 0.0
        %896 = vmatpush1.msra.mxu0 %v850
        %897 = vmatprep.subr.mxu0 0.0
        %898 = vmatpush1.msra.mxu0 %v849
        %899 = vmatprep.subr.mxu0 0.0
        %900 = vmatpush1.msra.mxu0 %v848
        %901 = vmatprep.subr.mxu0 0.0
        %902 = vmatpush1.msra.mxu0 %v847
        %903 = vmatprep.subr.mxu0 0.0
        %904 = vmatpush1.msra.mxu0 %v846
        %905 = vmatprep.subr.mxu0 0.0
        %906 = vmatpush1.msra.mxu0 %v845
        %907 = vmatprep.subr.mxu0 0.0
        %908 = vmatpush1.msra.mxu0 %v844
        %909 = vmatprep.subr.mxu0 0.0
        %910 = vmatpush1.msra.mxu0 %v843
        %911 = vmatprep.subr.mxu0 0.0
        %912 = vmatpush2.msra.mxu0 %v874
        %913 = vmatprep.subr.mxu0 0.0
        %914 = vmatpush2.msra.mxu0 %v873
        %915 = vmatprep.subr.mxu0 0.0
        %916 = vmatpush2.msra.mxu0 %v872
        %917 = vmatprep.subr.mxu0 0.0
        %918 = vmatpush2.msra.mxu0 %v871
        %919 = vmatprep.subr.mxu0 0.0
        %920 = vmatpush2.msra.mxu0 %v870
        %921 = vmatprep.subr.mxu0 0.0
        %922 = vmatpush2.msra.mxu0 %v869
        %923 = vmatprep.subr.mxu0 0.0
        %924 = vmatpush2.msra.mxu0 %v868
        %925 = vmatprep.subr.mxu0 0.0
        %926 = vmatpush2.msra.mxu0 %v867
        %927 = vmatprep.subr.mxu0 0.0
        %928 = vmatpush2.msra.mxu0 %v866
        %929 = vmatprep.subr.mxu0 0.0
        %930 = vmatpush2.msra.mxu0 %v865
        %931 = vmatprep.subr.mxu0 0.0
        %932 = vmatpush2.msra.mxu0 %v864
        %933 = vmatprep.subr.mxu0 0.0
        %934 = vmatpush2.msra.mxu0 %v863
        %935 = vmatprep.subr.mxu0 0.0
        %936 = vmatpush2.msra.mxu0 %v862
        %937 = vmatprep.subr.mxu0 0.0
        %938 = vmatpush2.msra.mxu0 %v861
        %939 = vmatprep.subr.mxu0 0.0
        %940 = vmatpush2.msra.mxu0 %v860
        %941 = vmatprep.subr.mxu0 0.0
        %942 = vmatpush2.msra.mxu0 %v859
        %943 = vmatprep.mubr.f32.mxu0 %v876
        %944 = vmatmul.mubr.f32.gmra.mxu0 %v875
        %v945 = vpop.f32.mrf.mxu0
        %v946 = vadd.f32 0.0, %v945
        %v947 = vpop.f32.mrf.mxu0
        %948 = vdwg.mxu0
        %v949 = vadd.f32 %v841, %v946
        %s950 = scalar_lea.vmem %s3, 768
        %v951 = vld [vmem:[%s950] sm:$0xff]
        %v952 = vld [vmem:[%s950 + $0x8] sm:$0xff]
        %v953 = vld [vmem:[%s950 + $0x10] sm:$0xff]
        %v954 = vld [vmem:[%s950 + $0x18] sm:$0xff]
        %v955 = vld [vmem:[%s950 + $0x20] sm:$0xff]
        %v956 = vld [vmem:[%s950 + $0x28] sm:$0xff]
        %v957 = vld [vmem:[%s950 + $0x30] sm:$0xff]
        %v958 = vld [vmem:[%s950 + $0x38] sm:$0xff]
        %v959 = vld [vmem:[%s950 + $0x40] sm:$0xff]
        %v960 = vld [vmem:[%s950 + $0x48] sm:$0xff]
        %v961 = vld [vmem:[%s950 + $0x50] sm:$0xff]
        %v962 = vld [vmem:[%s950 + $0x58] sm:$0xff]
        %v963 = vld [vmem:[%s950 + $0x60] sm:$0xff]
        %v964 = vld [vmem:[%s950 + $0x68] sm:$0xff]
        %v965 = vld [vmem:[%s950 + $0x70] sm:$0xff]
        %v966 = vld [vmem:[%s950 + $0x78] sm:$0xff]
        %v967 = vld [vmem:[%s950 + $0x80] sm:$0xff]
        %v968 = vld [vmem:[%s950 + $0x88] sm:$0xff]
        %v969 = vld [vmem:[%s950 + $0x90] sm:$0xff]
        %v970 = vld [vmem:[%s950 + $0x98] sm:$0xff]
        %v971 = vld [vmem:[%s950 + $0xa0] sm:$0xff]
        %v972 = vld [vmem:[%s950 + $0xa8] sm:$0xff]
        %v973 = vld [vmem:[%s950 + $0xb0] sm:$0xff]
        %v974 = vld [vmem:[%s950 + $0xb8] sm:$0xff]
        %v975 = vld [vmem:[%s950 + $0xc0] sm:$0xff]
        %v976 = vld [vmem:[%s950 + $0xc8] sm:$0xff]
        %v977 = vld [vmem:[%s950 + $0xd0] sm:$0xff]
        %v978 = vld [vmem:[%s950 + $0xd8] sm:$0xff]
        %v979 = vld [vmem:[%s950 + $0xe0] sm:$0xff]
        %v980 = vld [vmem:[%s950 + $0xe8] sm:$0xff]
        %v981 = vld [vmem:[%s950 + $0xf0] sm:$0xff]
        %v982 = vld [vmem:[%s950 + $0xf8] sm:$0xff]
        %v983 = vrot.slane %v624, 3
        %v984 = vrot.slane %v625, 3
        %987 = vmatprep.subr.mxu0 0.0
        %988 = vmatpush1.msra.mxu0 %v966
        %989 = vmatprep.subr.mxu0 0.0
        %990 = vmatpush1.msra.mxu0 %v965
        %991 = vmatprep.subr.mxu0 0.0
        %992 = vmatpush1.msra.mxu0 %v964
        %993 = vmatprep.subr.mxu0 0.0
        %994 = vmatpush1.msra.mxu0 %v963
        %995 = vmatprep.subr.mxu0 0.0
        %996 = vmatpush1.msra.mxu0 %v962
        %997 = vmatprep.subr.mxu0 0.0
        %998 = vmatpush1.msra.mxu0 %v961
        %999 = vmatprep.subr.mxu0 0.0
        %1000 = vmatpush1.msra.mxu0 %v960
        %1001 = vmatprep.subr.mxu0 0.0
        %1002 = vmatpush1.msra.mxu0 %v959
        %1003 = vmatprep.subr.mxu0 0.0
        %1004 = vmatpush1.msra.mxu0 %v958
        %1005 = vmatprep.subr.mxu0 0.0
        %1006 = vmatpush1.msra.mxu0 %v957
        %1007 = vmatprep.subr.mxu0 0.0
        %1008 = vmatpush1.msra.mxu0 %v956
        %1009 = vmatprep.subr.mxu0 0.0
        %1010 = vmatpush1.msra.mxu0 %v955
        %1011 = vmatprep.subr.mxu0 0.0
        %1012 = vmatpush1.msra.mxu0 %v954
        %1013 = vmatprep.subr.mxu0 0.0
        %1014 = vmatpush1.msra.mxu0 %v953
        %1015 = vmatprep.subr.mxu0 0.0
        %1016 = vmatpush1.msra.mxu0 %v952
        %1017 = vmatprep.subr.mxu0 0.0
        %1018 = vmatpush1.msra.mxu0 %v951
        %1019 = vmatprep.subr.mxu0 0.0
        %1020 = vmatpush2.msra.mxu0 %v982
        %1021 = vmatprep.subr.mxu0 0.0
        %1022 = vmatpush2.msra.mxu0 %v981
        %1023 = vmatprep.subr.mxu0 0.0
        %1024 = vmatpush2.msra.mxu0 %v980
        %1025 = vmatprep.subr.mxu0 0.0
        %1026 = vmatpush2.msra.mxu0 %v979
        %1027 = vmatprep.subr.mxu0 0.0
        %1028 = vmatpush2.msra.mxu0 %v978
        %1029 = vmatprep.subr.mxu0 0.0
        %1030 = vmatpush2.msra.mxu0 %v977
        %1031 = vmatprep.subr.mxu0 0.0
        %1032 = vmatpush2.msra.mxu0 %v976
        %1033 = vmatprep.subr.mxu0 0.0
        %1034 = vmatpush2.msra.mxu0 %v975
        %1035 = vmatprep.subr.mxu0 0.0
        %1036 = vmatpush2.msra.mxu0 %v974
        %1037 = vmatprep.subr.mxu0 0.0
        %1038 = vmatpush2.msra.mxu0 %v973
        %1039 = vmatprep.subr.mxu0 0.0
        %1040 = vmatpush2.msra.mxu0 %v972
        %1041 = vmatprep.subr.mxu0 0.0
        %1042 = vmatpush2.msra.mxu0 %v971
        %1043 = vmatprep.subr.mxu0 0.0
        %1044 = vmatpush2.msra.mxu0 %v970
        %1045 = vmatprep.subr.mxu0 0.0
        %1046 = vmatpush2.msra.mxu0 %v969
        %1047 = vmatprep.subr.mxu0 0.0
        %1048 = vmatpush2.msra.mxu0 %v968
        %1049 = vmatprep.subr.mxu0 0.0
        %1050 = vmatpush2.msra.mxu0 %v967
        %1051 = vmatprep.mubr.f32.mxu0 %v984
        %1052 = vmatmul.mubr.f32.gmra.mxu0 %v983
        %v1053 = vpop.f32.mrf.mxu0
        %v1054 = vadd.f32 0.0, %v1053
        %v1055 = vpop.f32.mrf.mxu0
        %1056 = vdwg.mxu0
        %v1057 = vadd.f32 %v949, %v1054
        %s1058 = scalar_lea.vmem %s3, 1024
        %v1059 = vld [vmem:[%s1058] sm:$0xff]
        %v1060 = vld [vmem:[%s1058 + $0x8] sm:$0xff]
        %v1061 = vld [vmem:[%s1058 + $0x10] sm:$0xff]
        %v1062 = vld [vmem:[%s1058 + $0x18] sm:$0xff]
        %v1063 = vld [vmem:[%s1058 + $0x20] sm:$0xff]
        %v1064 = vld [vmem:[%s1058 + $0x28] sm:$0xff]
        %v1065 = vld [vmem:[%s1058 + $0x30] sm:$0xff]
        %v1066 = vld [vmem:[%s1058 + $0x38] sm:$0xff]
        %v1067 = vld [vmem:[%s1058 + $0x40] sm:$0xff]
        %v1068 = vld [vmem:[%s1058 + $0x48] sm:$0xff]
        %v1069 = vld [vmem:[%s1058 + $0x50] sm:$0xff]
        %v1070 = vld [vmem:[%s1058 + $0x58] sm:$0xff]
        %v1071 = vld [vmem:[%s1058 + $0x60] sm:$0xff]
        %v1072 = vld [vmem:[%s1058 + $0x68] sm:$0xff]
        %v1073 = vld [vmem:[%s1058 + $0x70] sm:$0xff]
        %v1074 = vld [vmem:[%s1058 + $0x78] sm:$0xff]
        %v1075 = vld [vmem:[%s1058 + $0x80] sm:$0xff]
        %v1076 = vld [vmem:[%s1058 + $0x88] sm:$0xff]
        %v1077 = vld [vmem:[%s1058 + $0x90] sm:$0xff]
        %v1078 = vld [vmem:[%s1058 + $0x98] sm:$0xff]
        %v1079 = vld [vmem:[%s1058 + $0xa0] sm:$0xff]
        %v1080 = vld [vmem:[%s1058 + $0xa8] sm:$0xff]
        %v1081 = vld [vmem:[%s1058 + $0xb0] sm:$0xff]
        %v1082 = vld [vmem:[%s1058 + $0xb8] sm:$0xff]
        %v1083 = vld [vmem:[%s1058 + $0xc0] sm:$0xff]
        %v1084 = vld [vmem:[%s1058 + $0xc8] sm:$0xff]
        %v1085 = vld [vmem:[%s1058 + $0xd0] sm:$0xff]
        %v1086 = vld [vmem:[%s1058 + $0xd8] sm:$0xff]
        %v1087 = vld [vmem:[%s1058 + $0xe0] sm:$0xff]
        %v1088 = vld [vmem:[%s1058 + $0xe8] sm:$0xff]
        %v1089 = vld [vmem:[%s1058 + $0xf0] sm:$0xff]
        %v1090 = vld [vmem:[%s1058 + $0xf8] sm:$0xff]
        %v1091 = vrot.slane %v624, 4
        %v1092 = vrot.slane %v625, 4
        %1095 = vmatprep.subr.mxu0 0.0
        %1096 = vmatpush1.msra.mxu0 %v1074
        %1097 = vmatprep.subr.mxu0 0.0
        %1098 = vmatpush1.msra.mxu0 %v1073
        %1099 = vmatprep.subr.mxu0 0.0
        %1100 = vmatpush1.msra.mxu0 %v1072
        %1101 = vmatprep.subr.mxu0 0.0
        %1102 = vmatpush1.msra.mxu0 %v1071
        %1103 = vmatprep.subr.mxu0 0.0
        %1104 = vmatpush1.msra.mxu0 %v1070
        %1105 = vmatprep.subr.mxu0 0.0
        %1106 = vmatpush1.msra.mxu0 %v1069
        %1107 = vmatprep.subr.mxu0 0.0
        %1108 = vmatpush1.msra.mxu0 %v1068
        %1109 = vmatprep.subr.mxu0 0.0
        %1110 = vmatpush1.msra.mxu0 %v1067
        %1111 = vmatprep.subr.mxu0 0.0
        %1112 = vmatpush1.msra.mxu0 %v1066
        %1113 = vmatprep.subr.mxu0 0.0
        %1114 = vmatpush1.msra.mxu0 %v1065
        %1115 = vmatprep.subr.mxu0 0.0
        %1116 = vmatpush1.msra.mxu0 %v1064
        %1117 = vmatprep.subr.mxu0 0.0
        %1118 = vmatpush1.msra.mxu0 %v1063
        %1119 = vmatprep.subr.mxu0 0.0
        %1120 = vmatpush1.msra.mxu0 %v1062
        %1121 = vmatprep.subr.mxu0 0.0
        %1122 = vmatpush1.msra.mxu0 %v1061
        %1123 = vmatprep.subr.mxu0 0.0
        %1124 = vmatpush1.msra.mxu0 %v1060
        %1125 = vmatprep.subr.mxu0 0.0
        %1126 = vmatpush1.msra.mxu0 %v1059
        %1127 = vmatprep.subr.mxu0 0.0
        %1128 = vmatpush2.msra.mxu0 %v1090
        %1129 = vmatprep.subr.mxu0 0.0
        %1130 = vmatpush2.msra.mxu0 %v1089
        %1131 = vmatprep.subr.mxu0 0.0
        %1132 = vmatpush2.msra.mxu0 %v1088
        %1133 = vmatprep.subr.mxu0 0.0
        %1134 = vmatpush2.msra.mxu0 %v1087
        %1135 = vmatprep.subr.mxu0 0.0
        %1136 = vmatpush2.msra.mxu0 %v1086
        %1137 = vmatprep.subr.mxu0 0.0
        %1138 = vmatpush2.msra.mxu0 %v1085
        %1139 = vmatprep.subr.mxu0 0.0
        %1140 = vmatpush2.msra.mxu0 %v1084
        %1141 = vmatprep.subr.mxu0 0.0
        %1142 = vmatpush2.msra.mxu0 %v1083
        %1143 = vmatprep.subr.mxu0 0.0
        %1144 = vmatpush2.msra.mxu0 %v1082
        %1145 = vmatprep.subr.mxu0 0.0
        %1146 = vmatpush2.msra.mxu0 %v1081
        %1147 = vmatprep.subr.mxu0 0.0
        %1148 = vmatpush2.msra.mxu0 %v1080
        %1149 = vmatprep.subr.mxu0 0.0
        %1150 = vmatpush2.msra.mxu0 %v1079
        %1151 = vmatprep.subr.mxu0 0.0
        %1152 = vmatpush2.msra.mxu0 %v1078
        %1153 = vmatprep.subr.mxu0 0.0
        %1154 = vmatpush2.msra.mxu0 %v1077
        %1155 = vmatprep.subr.mxu0 0.0
        %1156 = vmatpush2.msra.mxu0 %v1076
        %1157 = vmatprep.subr.mxu0 0.0
        %1158 = vmatpush2.msra.mxu0 %v1075
        %1159 = vmatprep.mubr.f32.mxu0 %v1092
        %1160 = vmatmul.mubr.f32.gmra.mxu0 %v1091
        %v1161 = vpop.f32.mrf.mxu0
        %v1162 = vadd.f32 0.0, %v1161
        %v1163 = vpop.f32.mrf.mxu0
        %1164 = vdwg.mxu0
        %v1165 = vadd.f32 %v1057, %v1162
        %s1166 = scalar_lea.vmem %s3, 1280
        %v1167 = vld [vmem:[%s1166] sm:$0xff]
        %v1168 = vld [vmem:[%s1166 + $0x8] sm:$0xff]
        %v1169 = vld [vmem:[%s1166 + $0x10] sm:$0xff]
        %v1170 = vld [vmem:[%s1166 + $0x18] sm:$0xff]
        %v1171 = vld [vmem:[%s1166 + $0x20] sm:$0xff]
        %v1172 = vld [vmem:[%s1166 + $0x28] sm:$0xff]
        %v1173 = vld [vmem:[%s1166 + $0x30] sm:$0xff]
        %v1174 = vld [vmem:[%s1166 + $0x38] sm:$0xff]
        %v1175 = vld [vmem:[%s1166 + $0x40] sm:$0xff]
        %v1176 = vld [vmem:[%s1166 + $0x48] sm:$0xff]
        %v1177 = vld [vmem:[%s1166 + $0x50] sm:$0xff]
        %v1178 = vld [vmem:[%s1166 + $0x58] sm:$0xff]
        %v1179 = vld [vmem:[%s1166 + $0x60] sm:$0xff]
        %v1180 = vld [vmem:[%s1166 + $0x68] sm:$0xff]
        %v1181 = vld [vmem:[%s1166 + $0x70] sm:$0xff]
        %v1182 = vld [vmem:[%s1166 + $0x78] sm:$0xff]
        %v1183 = vld [vmem:[%s1166 + $0x80] sm:$0xff]
        %v1184 = vld [vmem:[%s1166 + $0x88] sm:$0xff]
        %v1185 = vld [vmem:[%s1166 + $0x90] sm:$0xff]
        %v1186 = vld [vmem:[%s1166 + $0x98] sm:$0xff]
        %v1187 = vld [vmem:[%s1166 + $0xa0] sm:$0xff]
        %v1188 = vld [vmem:[%s1166 + $0xa8] sm:$0xff]
        %v1189 = vld [vmem:[%s1166 + $0xb0] sm:$0xff]
        %v1190 = vld [vmem:[%s1166 + $0xb8] sm:$0xff]
        %v1191 = vld [vmem:[%s1166 + $0xc0] sm:$0xff]
        %v1192 = vld [vmem:[%s1166 + $0xc8] sm:$0xff]
        %v1193 = vld [vmem:[%s1166 + $0xd0] sm:$0xff]
        %v1194 = vld [vmem:[%s1166 + $0xd8] sm:$0xff]
        %v1195 = vld [vmem:[%s1166 + $0xe0] sm:$0xff]
        %v1196 = vld [vmem:[%s1166 + $0xe8] sm:$0xff]
        %v1197 = vld [vmem:[%s1166 + $0xf0] sm:$0xff]
        %v1198 = vld [vmem:[%s1166 + $0xf8] sm:$0xff]
        %v1199 = vrot.slane %v624, 5
        %v1200 = vrot.slane %v625, 5
        %1203 = vmatprep.subr.mxu0 0.0
        %1204 = vmatpush1.msra.mxu0 %v1182
        %1205 = vmatprep.subr.mxu0 0.0
        %1206 = vmatpush1.msra.mxu0 %v1181
        %1207 = vmatprep.subr.mxu0 0.0
        %1208 = vmatpush1.msra.mxu0 %v1180
        %1209 = vmatprep.subr.mxu0 0.0
        %1210 = vmatpush1.msra.mxu0 %v1179
        %1211 = vmatprep.subr.mxu0 0.0
        %1212 = vmatpush1.msra.mxu0 %v1178
        %1213 = vmatprep.subr.mxu0 0.0
        %1214 = vmatpush1.msra.mxu0 %v1177
        %1215 = vmatprep.subr.mxu0 0.0
        %1216 = vmatpush1.msra.mxu0 %v1176
        %1217 = vmatprep.subr.mxu0 0.0
        %1218 = vmatpush1.msra.mxu0 %v1175
        %1219 = vmatprep.subr.mxu0 0.0
        %1220 = vmatpush1.msra.mxu0 %v1174
        %1221 = vmatprep.subr.mxu0 0.0
        %1222 = vmatpush1.msra.mxu0 %v1173
        %1223 = vmatprep.subr.mxu0 0.0
        %1224 = vmatpush1.msra.mxu0 %v1172
        %1225 = vmatprep.subr.mxu0 0.0
        %1226 = vmatpush1.msra.mxu0 %v1171
        %1227 = vmatprep.subr.mxu0 0.0
        %1228 = vmatpush1.msra.mxu0 %v1170
        %1229 = vmatprep.subr.mxu0 0.0
        %1230 = vmatpush1.msra.mxu0 %v1169
        %1231 = vmatprep.subr.mxu0 0.0
        %1232 = vmatpush1.msra.mxu0 %v1168
        %1233 = vmatprep.subr.mxu0 0.0
        %1234 = vmatpush1.msra.mxu0 %v1167
        %1235 = vmatprep.subr.mxu0 0.0
        %1236 = vmatpush2.msra.mxu0 %v1198
        %1237 = vmatprep.subr.mxu0 0.0
        %1238 = vmatpush2.msra.mxu0 %v1197
        %1239 = vmatprep.subr.mxu0 0.0
        %1240 = vmatpush2.msra.mxu0 %v1196
        %1241 = vmatprep.subr.mxu0 0.0
        %1242 = vmatpush2.msra.mxu0 %v1195
        %1243 = vmatprep.subr.mxu0 0.0
        %1244 = vmatpush2.msra.mxu0 %v1194
        %1245 = vmatprep.subr.mxu0 0.0
        %1246 = vmatpush2.msra.mxu0 %v1193
        %1247 = vmatprep.subr.mxu0 0.0
        %1248 = vmatpush2.msra.mxu0 %v1192
        %1249 = vmatprep.subr.mxu0 0.0
        %1250 = vmatpush2.msra.mxu0 %v1191
        %1251 = vmatprep.subr.mxu0 0.0
        %1252 = vmatpush2.msra.mxu0 %v1190
        %1253 = vmatprep.subr.mxu0 0.0
        %1254 = vmatpush2.msra.mxu0 %v1189
        %1255 = vmatprep.subr.mxu0 0.0
        %1256 = vmatpush2.msra.mxu0 %v1188
        %1257 = vmatprep.subr.mxu0 0.0
        %1258 = vmatpush2.msra.mxu0 %v1187
        %1259 = vmatprep.subr.mxu0 0.0
        %1260 = vmatpush2.msra.mxu0 %v1186
        %1261 = vmatprep.subr.mxu0 0.0
        %1262 = vmatpush2.msra.mxu0 %v1185
        %1263 = vmatprep.subr.mxu0 0.0
        %1264 = vmatpush2.msra.mxu0 %v1184
        %1265 = vmatprep.subr.mxu0 0.0
        %1266 = vmatpush2.msra.mxu0 %v1183
        %1267 = vmatprep.mubr.f32.mxu0 %v1200
        %1268 = vmatmul.mubr.f32.gmra.mxu0 %v1199
        %v1269 = vpop.f32.mrf.mxu0
        %v1270 = vadd.f32 0.0, %v1269
        %v1271 = vpop.f32.mrf.mxu0
        %1272 = vdwg.mxu0
        %v1273 = vadd.f32 %v1165, %v1270
        %s1274 = scalar_lea.vmem %s3, 1536
        %v1275 = vld [vmem:[%s1274] sm:$0xff]
        %v1276 = vld [vmem:[%s1274 + $0x8] sm:$0xff]
        %v1277 = vld [vmem:[%s1274 + $0x10] sm:$0xff]
        %v1278 = vld [vmem:[%s1274 + $0x18] sm:$0xff]
        %v1279 = vld [vmem:[%s1274 + $0x20] sm:$0xff]
        %v1280 = vld [vmem:[%s1274 + $0x28] sm:$0xff]
        %v1281 = vld [vmem:[%s1274 + $0x30] sm:$0xff]
        %v1282 = vld [vmem:[%s1274 + $0x38] sm:$0xff]
        %v1283 = vld [vmem:[%s1274 + $0x40] sm:$0xff]
        %v1284 = vld [vmem:[%s1274 + $0x48] sm:$0xff]
        %v1285 = vld [vmem:[%s1274 + $0x50] sm:$0xff]
        %v1286 = vld [vmem:[%s1274 + $0x58] sm:$0xff]
        %v1287 = vld [vmem:[%s1274 + $0x60] sm:$0xff]
        %v1288 = vld [vmem:[%s1274 + $0x68] sm:$0xff]
        %v1289 = vld [vmem:[%s1274 + $0x70] sm:$0xff]
        %v1290 = vld [vmem:[%s1274 + $0x78] sm:$0xff]
        %v1291 = vld [vmem:[%s1274 + $0x80] sm:$0xff]
        %v1292 = vld [vmem:[%s1274 + $0x88] sm:$0xff]
        %v1293 = vld [vmem:[%s1274 + $0x90] sm:$0xff]
        %v1294 = vld [vmem:[%s1274 + $0x98] sm:$0xff]
        %v1295 = vld [vmem:[%s1274 + $0xa0] sm:$0xff]
        %v1296 = vld [vmem:[%s1274 + $0xa8] sm:$0xff]
        %v1297 = vld [vmem:[%s1274 + $0xb0] sm:$0xff]
        %v1298 = vld [vmem:[%s1274 + $0xb8] sm:$0xff]
        %v1299 = vld [vmem:[%s1274 + $0xc0] sm:$0xff]
        %v1300 = vld [vmem:[%s1274 + $0xc8] sm:$0xff]
        %v1301 = vld [vmem:[%s1274 + $0xd0] sm:$0xff]
        %v1302 = vld [vmem:[%s1274 + $0xd8] sm:$0xff]
        %v1303 = vld [vmem:[%s1274 + $0xe0] sm:$0xff]
        %v1304 = vld [vmem:[%s1274 + $0xe8] sm:$0xff]
        %v1305 = vld [vmem:[%s1274 + $0xf0] sm:$0xff]
        %v1306 = vld [vmem:[%s1274 + $0xf8] sm:$0xff]
        %v1307 = vrot.slane %v624, 6
        %v1308 = vrot.slane %v625, 6
        %1311 = vmatprep.subr.mxu0 0.0
        %1312 = vmatpush1.msra.mxu0 %v1290
        %1313 = vmatprep.subr.mxu0 0.0
        %1314 = vmatpush1.msra.mxu0 %v1289
        %1315 = vmatprep.subr.mxu0 0.0
        %1316 = vmatpush1.msra.mxu0 %v1288
        %1317 = vmatprep.subr.mxu0 0.0
        %1318 = vmatpush1.msra.mxu0 %v1287
        %1319 = vmatprep.subr.mxu0 0.0
        %1320 = vmatpush1.msra.mxu0 %v1286
        %1321 = vmatprep.subr.mxu0 0.0
        %1322 = vmatpush1.msra.mxu0 %v1285
        %1323 = vmatprep.subr.mxu0 0.0
        %1324 = vmatpush1.msra.mxu0 %v1284
        %1325 = vmatprep.subr.mxu0 0.0
        %1326 = vmatpush1.msra.mxu0 %v1283
        %1327 = vmatprep.subr.mxu0 0.0
        %1328 = vmatpush1.msra.mxu0 %v1282
        %1329 = vmatprep.subr.mxu0 0.0
        %1330 = vmatpush1.msra.mxu0 %v1281
        %1331 = vmatprep.subr.mxu0 0.0
        %1332 = vmatpush1.msra.mxu0 %v1280
        %1333 = vmatprep.subr.mxu0 0.0
        %1334 = vmatpush1.msra.mxu0 %v1279
        %1335 = vmatprep.subr.mxu0 0.0
        %1336 = vmatpush1.msra.mxu0 %v1278
        %1337 = vmatprep.subr.mxu0 0.0
        %1338 = vmatpush1.msra.mxu0 %v1277
        %1339 = vmatprep.subr.mxu0 0.0
        %1340 = vmatpush1.msra.mxu0 %v1276
        %1341 = vmatprep.subr.mxu0 0.0
        %1342 = vmatpush1.msra.mxu0 %v1275
        %1343 = vmatprep.subr.mxu0 0.0
        %1344 = vmatpush2.msra.mxu0 %v1306
        %1345 = vmatprep.subr.mxu0 0.0
        %1346 = vmatpush2.msra.mxu0 %v1305
        %1347 = vmatprep.subr.mxu0 0.0
        %1348 = vmatpush2.msra.mxu0 %v1304
        %1349 = vmatprep.subr.mxu0 0.0
        %1350 = vmatpush2.msra.mxu0 %v1303
        %1351 = vmatprep.subr.mxu0 0.0
        %1352 = vmatpush2.msra.mxu0 %v1302
        %1353 = vmatprep.subr.mxu0 0.0
        %1354 = vmatpush2.msra.mxu0 %v1301
        %1355 = vmatprep.subr.mxu0 0.0
        %1356 = vmatpush2.msra.mxu0 %v1300
        %1357 = vmatprep.subr.mxu0 0.0
        %1358 = vmatpush2.msra.mxu0 %v1299
        %1359 = vmatprep.subr.mxu0 0.0
        %1360 = vmatpush2.msra.mxu0 %v1298
        %1361 = vmatprep.subr.mxu0 0.0
        %1362 = vmatpush2.msra.mxu0 %v1297
        %1363 = vmatprep.subr.mxu0 0.0
        %1364 = vmatpush2.msra.mxu0 %v1296
        %1365 = vmatprep.subr.mxu0 0.0
        %1366 = vmatpush2.msra.mxu0 %v1295
        %1367 = vmatprep.subr.mxu0 0.0
        %1368 = vmatpush2.msra.mxu0 %v1294
        %1369 = vmatprep.subr.mxu0 0.0
        %1370 = vmatpush2.msra.mxu0 %v1293
        %1371 = vmatprep.subr.mxu0 0.0
        %1372 = vmatpush2.msra.mxu0 %v1292
        %1373 = vmatprep.subr.mxu0 0.0
        %1374 = vmatpush2.msra.mxu0 %v1291
        %1375 = vmatprep.mubr.f32.mxu0 %v1308
        %1376 = vmatmul.mubr.f32.gmra.mxu0 %v1307
        %v1377 = vpop.f32.mrf.mxu0
        %v1378 = vadd.f32 0.0, %v1377
        %v1379 = vpop.f32.mrf.mxu0
        %1380 = vdwg.mxu0
        %v1381 = vadd.f32 %v1273, %v1378
        %s1382 = scalar_lea.vmem %s3, 1792
        %v1383 = vld [vmem:[%s1382] sm:$0xff]
        %v1384 = vld [vmem:[%s1382 + $0x8] sm:$0xff]
        %v1385 = vld [vmem:[%s1382 + $0x10] sm:$0xff]
        %v1386 = vld [vmem:[%s1382 + $0x18] sm:$0xff]
        %v1387 = vld [vmem:[%s1382 + $0x20] sm:$0xff]
        %v1388 = vld [vmem:[%s1382 + $0x28] sm:$0xff]
        %v1389 = vld [vmem:[%s1382 + $0x30] sm:$0xff]
        %v1390 = vld [vmem:[%s1382 + $0x38] sm:$0xff]
        %v1391 = vld [vmem:[%s1382 + $0x40] sm:$0xff]
        %v1392 = vld [vmem:[%s1382 + $0x48] sm:$0xff]
        %v1393 = vld [vmem:[%s1382 + $0x50] sm:$0xff]
        %v1394 = vld [vmem:[%s1382 + $0x58] sm:$0xff]
        %v1395 = vld [vmem:[%s1382 + $0x60] sm:$0xff]
        %v1396 = vld [vmem:[%s1382 + $0x68] sm:$0xff]
        %v1397 = vld [vmem:[%s1382 + $0x70] sm:$0xff]
        %v1398 = vld [vmem:[%s1382 + $0x78] sm:$0xff]
        %v1399 = vld [vmem:[%s1382 + $0x80] sm:$0xff]
        %v1400 = vld [vmem:[%s1382 + $0x88] sm:$0xff]
        %v1401 = vld [vmem:[%s1382 + $0x90] sm:$0xff]
        %v1402 = vld [vmem:[%s1382 + $0x98] sm:$0xff]
        %v1403 = vld [vmem:[%s1382 + $0xa0] sm:$0xff]
        %v1404 = vld [vmem:[%s1382 + $0xa8] sm:$0xff]
        %v1405 = vld [vmem:[%s1382 + $0xb0] sm:$0xff]
        %v1406 = vld [vmem:[%s1382 + $0xb8] sm:$0xff]
        %v1407 = vld [vmem:[%s1382 + $0xc0] sm:$0xff]
        %v1408 = vld [vmem:[%s1382 + $0xc8] sm:$0xff]
        %v1409 = vld [vmem:[%s1382 + $0xd0] sm:$0xff]
        %v1410 = vld [vmem:[%s1382 + $0xd8] sm:$0xff]
        %v1411 = vld [vmem:[%s1382 + $0xe0] sm:$0xff]
        %v1412 = vld [vmem:[%s1382 + $0xe8] sm:$0xff]
        %v1413 = vld [vmem:[%s1382 + $0xf0] sm:$0xff]
        %v1414 = vld [vmem:[%s1382 + $0xf8] sm:$0xff]
        %v1415 = vrot.slane %v624, 7
        %v1416 = vrot.slane %v625, 7
        %1419 = vmatprep.subr.mxu0 0.0
        %1420 = vmatpush1.msra.mxu0 %v1398
        %1421 = vmatprep.subr.mxu0 0.0
        %1422 = vmatpush1.msra.mxu0 %v1397
        %1423 = vmatprep.subr.mxu0 0.0
        %1424 = vmatpush1.msra.mxu0 %v1396
        %1425 = vmatprep.subr.mxu0 0.0
        %1426 = vmatpush1.msra.mxu0 %v1395
        %1427 = vmatprep.subr.mxu0 0.0
        %1428 = vmatpush1.msra.mxu0 %v1394
        %1429 = vmatprep.subr.mxu0 0.0
        %1430 = vmatpush1.msra.mxu0 %v1393
        %1431 = vmatprep.subr.mxu0 0.0
        %1432 = vmatpush1.msra.mxu0 %v1392
        %1433 = vmatprep.subr.mxu0 0.0
        %1434 = vmatpush1.msra.mxu0 %v1391
        %1435 = vmatprep.subr.mxu0 0.0
        %1436 = vmatpush1.msra.mxu0 %v1390
        %1437 = vmatprep.subr.mxu0 0.0
        %1438 = vmatpush1.msra.mxu0 %v1389
        %1439 = vmatprep.subr.mxu0 0.0
        %1440 = vmatpush1.msra.mxu0 %v1388
        %1441 = vmatprep.subr.mxu0 0.0
        %1442 = vmatpush1.msra.mxu0 %v1387
        %1443 = vmatprep.subr.mxu0 0.0
        %1444 = vmatpush1.msra.mxu0 %v1386
        %1445 = vmatprep.subr.mxu0 0.0
        %1446 = vmatpush1.msra.mxu0 %v1385
        %1447 = vmatprep.subr.mxu0 0.0
        %1448 = vmatpush1.msra.mxu0 %v1384
        %1449 = vmatprep.subr.mxu0 0.0
        %1450 = vmatpush1.msra.mxu0 %v1383
        %1451 = vmatprep.subr.mxu0 0.0
        %1452 = vmatpush2.msra.mxu0 %v1414
        %1453 = vmatprep.subr.mxu0 0.0
        %1454 = vmatpush2.msra.mxu0 %v1413
        %1455 = vmatprep.subr.mxu0 0.0
        %1456 = vmatpush2.msra.mxu0 %v1412
        %1457 = vmatprep.subr.mxu0 0.0
        %1458 = vmatpush2.msra.mxu0 %v1411
        %1459 = vmatprep.subr.mxu0 0.0
        %1460 = vmatpush2.msra.mxu0 %v1410
        %1461 = vmatprep.subr.mxu0 0.0
        %1462 = vmatpush2.msra.mxu0 %v1409
        %1463 = vmatprep.subr.mxu0 0.0
        %1464 = vmatpush2.msra.mxu0 %v1408
        %1465 = vmatprep.subr.mxu0 0.0
        %1466 = vmatpush2.msra.mxu0 %v1407
        %1467 = vmatprep.subr.mxu0 0.0
        %1468 = vmatpush2.msra.mxu0 %v1406
        %1469 = vmatprep.subr.mxu0 0.0
        %1470 = vmatpush2.msra.mxu0 %v1405
        %1471 = vmatprep.subr.mxu0 0.0
        %1472 = vmatpush2.msra.mxu0 %v1404
        %1473 = vmatprep.subr.mxu0 0.0
        %1474 = vmatpush2.msra.mxu0 %v1403
        %1475 = vmatprep.subr.mxu0 0.0
        %1476 = vmatpush2.msra.mxu0 %v1402
        %1477 = vmatprep.subr.mxu0 0.0
        %1478 = vmatpush2.msra.mxu0 %v1401
        %1479 = vmatprep.subr.mxu0 0.0
        %1480 = vmatpush2.msra.mxu0 %v1400
        %1481 = vmatprep.subr.mxu0 0.0
        %1482 = vmatpush2.msra.mxu0 %v1399
        %1483 = vmatprep.mubr.f32.mxu0 %v1416
        %1484 = vmatmul.mubr.f32.gmra.mxu0 %v1415
        %v1485 = vpop.f32.mrf.mxu0
        %v1486 = vadd.f32 0.0, %v1485
        %v1487 = vpop.f32.mrf.mxu0
        %1488 = vdwg.mxu0
        %v1489 = vadd.f32 %v1381, %v1486
        %s1490 = scalar_lea.vmem %s3, 2048
        %v1491 = vld [vmem:[%s1490] sm:$0xff]
        %v1492 = vld [vmem:[%s1490 + $0x8] sm:$0xff]
        %v1493 = vld [vmem:[%s1490 + $0x10] sm:$0xff]
        %v1494 = vld [vmem:[%s1490 + $0x18] sm:$0xff]
        %v1495 = vld [vmem:[%s1490 + $0x20] sm:$0xff]
        %v1496 = vld [vmem:[%s1490 + $0x28] sm:$0xff]
        %v1497 = vld [vmem:[%s1490 + $0x30] sm:$0xff]
        %v1498 = vld [vmem:[%s1490 + $0x38] sm:$0xff]
        %v1499 = vld [vmem:[%s1490 + $0x40] sm:$0xff]
        %v1500 = vld [vmem:[%s1490 + $0x48] sm:$0xff]
        %v1501 = vld [vmem:[%s1490 + $0x50] sm:$0xff]
        %v1502 = vld [vmem:[%s1490 + $0x58] sm:$0xff]
        %v1503 = vld [vmem:[%s1490 + $0x60] sm:$0xff]
        %v1504 = vld [vmem:[%s1490 + $0x68] sm:$0xff]
        %v1505 = vld [vmem:[%s1490 + $0x70] sm:$0xff]
        %v1506 = vld [vmem:[%s1490 + $0x78] sm:$0xff]
        %v1507 = vld [vmem:[%s1490 + $0x80] sm:$0xff]
        %v1508 = vld [vmem:[%s1490 + $0x88] sm:$0xff]
        %v1509 = vld [vmem:[%s1490 + $0x90] sm:$0xff]
        %v1510 = vld [vmem:[%s1490 + $0x98] sm:$0xff]
        %v1511 = vld [vmem:[%s1490 + $0xa0] sm:$0xff]
        %v1512 = vld [vmem:[%s1490 + $0xa8] sm:$0xff]
        %v1513 = vld [vmem:[%s1490 + $0xb0] sm:$0xff]
        %v1514 = vld [vmem:[%s1490 + $0xb8] sm:$0xff]
        %v1515 = vld [vmem:[%s1490 + $0xc0] sm:$0xff]
        %v1516 = vld [vmem:[%s1490 + $0xc8] sm:$0xff]
        %v1517 = vld [vmem:[%s1490 + $0xd0] sm:$0xff]
        %v1518 = vld [vmem:[%s1490 + $0xd8] sm:$0xff]
        %v1519 = vld [vmem:[%s1490 + $0xe0] sm:$0xff]
        %v1520 = vld [vmem:[%s1490 + $0xe8] sm:$0xff]
        %v1521 = vld [vmem:[%s1490 + $0xf0] sm:$0xff]
        %v1522 = vld [vmem:[%s1490 + $0xf8] sm:$0xff]
        %1523 = vmatprep.subr.mxu0 0.0
        %1524 = vmatpush1.msra.mxu0 %v1506
        %1525 = vmatprep.subr.mxu0 0.0
        %1526 = vmatpush1.msra.mxu0 %v1505
        %1527 = vmatprep.subr.mxu0 0.0
        %1528 = vmatpush1.msra.mxu0 %v1504
        %1529 = vmatprep.subr.mxu0 0.0
        %1530 = vmatpush1.msra.mxu0 %v1503
        %1531 = vmatprep.subr.mxu0 0.0
        %1532 = vmatpush1.msra.mxu0 %v1502
        %1533 = vmatprep.subr.mxu0 0.0
        %1534 = vmatpush1.msra.mxu0 %v1501
        %1535 = vmatprep.subr.mxu0 0.0
        %1536 = vmatpush1.msra.mxu0 %v1500
        %1537 = vmatprep.subr.mxu0 0.0
        %1538 = vmatpush1.msra.mxu0 %v1499
        %1539 = vmatprep.subr.mxu0 0.0
        %1540 = vmatpush1.msra.mxu0 %v1498
        %1541 = vmatprep.subr.mxu0 0.0
        %1542 = vmatpush1.msra.mxu0 %v1497
        %1543 = vmatprep.subr.mxu0 0.0
        %1544 = vmatpush1.msra.mxu0 %v1496
        %1545 = vmatprep.subr.mxu0 0.0
        %1546 = vmatpush1.msra.mxu0 %v1495
        %1547 = vmatprep.subr.mxu0 0.0
        %1548 = vmatpush1.msra.mxu0 %v1494
        %1549 = vmatprep.subr.mxu0 0.0
        %1550 = vmatpush1.msra.mxu0 %v1493
        %1551 = vmatprep.subr.mxu0 0.0
        %1552 = vmatpush1.msra.mxu0 %v1492
        %1553 = vmatprep.subr.mxu0 0.0
        %1554 = vmatpush1.msra.mxu0 %v1491
        %1555 = vmatprep.subr.mxu0 0.0
        %1556 = vmatpush2.msra.mxu0 %v1522
        %1557 = vmatprep.subr.mxu0 0.0
        %1558 = vmatpush2.msra.mxu0 %v1521
        %1559 = vmatprep.subr.mxu0 0.0
        %1560 = vmatpush2.msra.mxu0 %v1520
        %1561 = vmatprep.subr.mxu0 0.0
        %1562 = vmatpush2.msra.mxu0 %v1519
        %1563 = vmatprep.subr.mxu0 0.0
        %1564 = vmatpush2.msra.mxu0 %v1518
        %1565 = vmatprep.subr.mxu0 0.0
        %1566 = vmatpush2.msra.mxu0 %v1517
        %1567 = vmatprep.subr.mxu0 0.0
        %1568 = vmatpush2.msra.mxu0 %v1516
        %1569 = vmatprep.subr.mxu0 0.0
        %1570 = vmatpush2.msra.mxu0 %v1515
        %1571 = vmatprep.subr.mxu0 0.0
        %1572 = vmatpush2.msra.mxu0 %v1514
        %1573 = vmatprep.subr.mxu0 0.0
        %1574 = vmatpush2.msra.mxu0 %v1513
        %1575 = vmatprep.subr.mxu0 0.0
        %1576 = vmatpush2.msra.mxu0 %v1512
        %1577 = vmatprep.subr.mxu0 0.0
        %1578 = vmatpush2.msra.mxu0 %v1511
        %1579 = vmatprep.subr.mxu0 0.0
        %1580 = vmatpush2.msra.mxu0 %v1510
        %1581 = vmatprep.subr.mxu0 0.0
        %1582 = vmatpush2.msra.mxu0 %v1509
        %1583 = vmatprep.subr.mxu0 0.0
        %1584 = vmatpush2.msra.mxu0 %v1508
        %1585 = vmatprep.subr.mxu0 0.0
        %1586 = vmatpush2.msra.mxu0 %v1507
        %1587 = vmatprep.mubr.f32.mxu0 %v627
        %1588 = vmatmul.mubr.f32.gmra.mxu0 %v626
        %v1589 = vpop.f32.mrf.mxu0
        %v1590 = vadd.f32 0.0, %v1589
        %v1591 = vpop.f32.mrf.mxu0
        %1592 = vdwg.mxu0
        %v1593 = vadd.f32 %v1489, %v1590
        %s1594 = scalar_lea.vmem %s3, 2304
        %v1595 = vld [vmem:[%s1594] sm:$0xff]
        %v1596 = vld [vmem:[%s1594 + $0x8] sm:$0xff]
        %v1597 = vld [vmem:[%s1594 + $0x10] sm:$0xff]
        %v1598 = vld [vmem:[%s1594 + $0x18] sm:$0xff]
        %v1599 = vld [vmem:[%s1594 + $0x20] sm:$0xff]
        %v1600 = vld [vmem:[%s1594 + $0x28] sm:$0xff]
        %v1601 = vld [vmem:[%s1594 + $0x30] sm:$0xff]
        %v1602 = vld [vmem:[%s1594 + $0x38] sm:$0xff]
        %v1603 = vld [vmem:[%s1594 + $0x40] sm:$0xff]
        %v1604 = vld [vmem:[%s1594 + $0x48] sm:$0xff]
        %v1605 = vld [vmem:[%s1594 + $0x50] sm:$0xff]
        %v1606 = vld [vmem:[%s1594 + $0x58] sm:$0xff]
        %v1607 = vld [vmem:[%s1594 + $0x60] sm:$0xff]
        %v1608 = vld [vmem:[%s1594 + $0x68] sm:$0xff]
        %v1609 = vld [vmem:[%s1594 + $0x70] sm:$0xff]
        %v1610 = vld [vmem:[%s1594 + $0x78] sm:$0xff]
        %v1611 = vld [vmem:[%s1594 + $0x80] sm:$0xff]
        %v1612 = vld [vmem:[%s1594 + $0x88] sm:$0xff]
        %v1613 = vld [vmem:[%s1594 + $0x90] sm:$0xff]
        %v1614 = vld [vmem:[%s1594 + $0x98] sm:$0xff]
        %v1615 = vld [vmem:[%s1594 + $0xa0] sm:$0xff]
        %v1616 = vld [vmem:[%s1594 + $0xa8] sm:$0xff]
        %v1617 = vld [vmem:[%s1594 + $0xb0] sm:$0xff]
        %v1618 = vld [vmem:[%s1594 + $0xb8] sm:$0xff]
        %v1619 = vld [vmem:[%s1594 + $0xc0] sm:$0xff]
        %v1620 = vld [vmem:[%s1594 + $0xc8] sm:$0xff]
        %v1621 = vld [vmem:[%s1594 + $0xd0] sm:$0xff]
        %v1622 = vld [vmem:[%s1594 + $0xd8] sm:$0xff]
        %v1623 = vld [vmem:[%s1594 + $0xe0] sm:$0xff]
        %v1624 = vld [vmem:[%s1594 + $0xe8] sm:$0xff]
        %v1625 = vld [vmem:[%s1594 + $0xf0] sm:$0xff]
        %v1626 = vld [vmem:[%s1594 + $0xf8] sm:$0xff]
        %v1629 = vrot.slane %v626, 1
        %v1630 = vrot.slane %v627, 1
        %1633 = vmatprep.subr.mxu0 0.0
        %1634 = vmatpush1.msra.mxu0 %v1610
        %1635 = vmatprep.subr.mxu0 0.0
        %1636 = vmatpush1.msra.mxu0 %v1609
        %1637 = vmatprep.subr.mxu0 0.0
        %1638 = vmatpush1.msra.mxu0 %v1608
        %1639 = vmatprep.subr.mxu0 0.0
        %1640 = vmatpush1.msra.mxu0 %v1607
        %1641 = vmatprep.subr.mxu0 0.0
        %1642 = vmatpush1.msra.mxu0 %v1606
        %1643 = vmatprep.subr.mxu0 0.0
        %1644 = vmatpush1.msra.mxu0 %v1605
        %1645 = vmatprep.subr.mxu0 0.0
        %1646 = vmatpush1.msra.mxu0 %v1604
        %1647 = vmatprep.subr.mxu0 0.0
        %1648 = vmatpush1.msra.mxu0 %v1603
        %1649 = vmatprep.subr.mxu0 0.0
        %1650 = vmatpush1.msra.mxu0 %v1602
        %1651 = vmatprep.subr.mxu0 0.0
        %1652 = vmatpush1.msra.mxu0 %v1601
        %1653 = vmatprep.subr.mxu0 0.0
        %1654 = vmatpush1.msra.mxu0 %v1600
        %1655 = vmatprep.subr.mxu0 0.0
        %1656 = vmatpush1.msra.mxu0 %v1599
        %1657 = vmatprep.subr.mxu0 0.0
        %1658 = vmatpush1.msra.mxu0 %v1598
        %1659 = vmatprep.subr.mxu0 0.0
        %1660 = vmatpush1.msra.mxu0 %v1597
        %1661 = vmatprep.subr.mxu0 0.0
        %1662 = vmatpush1.msra.mxu0 %v1596
        %1663 = vmatprep.subr.mxu0 0.0
        %1664 = vmatpush1.msra.mxu0 %v1595
        %1665 = vmatprep.subr.mxu0 0.0
        %1666 = vmatpush2.msra.mxu0 %v1626
        %1667 = vmatprep.subr.mxu0 0.0
        %1668 = vmatpush2.msra.mxu0 %v1625
        %1669 = vmatprep.subr.mxu0 0.0
        %1670 = vmatpush2.msra.mxu0 %v1624
        %1671 = vmatprep.subr.mxu0 0.0
        %1672 = vmatpush2.msra.mxu0 %v1623
        %1673 = vmatprep.subr.mxu0 0.0
        %1674 = vmatpush2.msra.mxu0 %v1622
        %1675 = vmatprep.subr.mxu0 0.0
        %1676 = vmatpush2.msra.mxu0 %v1621
        %1677 = vmatprep.subr.mxu0 0.0
        %1678 = vmatpush2.msra.mxu0 %v1620
        %1679 = vmatprep.subr.mxu0 0.0
        %1680 = vmatpush2.msra.mxu0 %v1619
        %1681 = vmatprep.subr.mxu0 0.0
        %1682 = vmatpush2.msra.mxu0 %v1618
        %1683 = vmatprep.subr.mxu0 0.0
        %1684 = vmatpush2.msra.mxu0 %v1617
        %1685 = vmatprep.subr.mxu0 0.0
        %1686 = vmatpush2.msra.mxu0 %v1616
        %1687 = vmatprep.subr.mxu0 0.0
        %1688 = vmatpush2.msra.mxu0 %v1615
        %1689 = vmatprep.subr.mxu0 0.0
        %1690 = vmatpush2.msra.mxu0 %v1614
        %1691 = vmatprep.subr.mxu0 0.0
        %1692 = vmatpush2.msra.mxu0 %v1613
        %1693 = vmatprep.subr.mxu0 0.0
        %1694 = vmatpush2.msra.mxu0 %v1612
        %1695 = vmatprep.subr.mxu0 0.0
        %1696 = vmatpush2.msra.mxu0 %v1611
        %1697 = vmatprep.mubr.f32.mxu0 %v1630
        %1698 = vmatmul.mubr.f32.gmra.mxu0 %v1629
        %v1699 = vpop.f32.mrf.mxu0
        %v1700 = vadd.f32 0.0, %v1699
        %v1701 = vpop.f32.mrf.mxu0
        %1702 = vdwg.mxu0
        %v1703 = vadd.f32 %v1593, %v1700
        %s1704 = scalar_lea.vmem %s3, 2560
        %v1705 = vld [vmem:[%s1704] sm:$0xff]
        %v1706 = vld [vmem:[%s1704 + $0x8] sm:$0xff]
        %v1707 = vld [vmem:[%s1704 + $0x10] sm:$0xff]
        %v1708 = vld [vmem:[%s1704 + $0x18] sm:$0xff]
        %v1709 = vld [vmem:[%s1704 + $0x20] sm:$0xff]
        %v1710 = vld [vmem:[%s1704 + $0x28] sm:$0xff]
        %v1711 = vld [vmem:[%s1704 + $0x30] sm:$0xff]
        %v1712 = vld [vmem:[%s1704 + $0x38] sm:$0xff]
        %v1713 = vld [vmem:[%s1704 + $0x40] sm:$0xff]
        %v1714 = vld [vmem:[%s1704 + $0x48] sm:$0xff]
        %v1715 = vld [vmem:[%s1704 + $0x50] sm:$0xff]
        %v1716 = vld [vmem:[%s1704 + $0x58] sm:$0xff]
        %v1717 = vld [vmem:[%s1704 + $0x60] sm:$0xff]
        %v1718 = vld [vmem:[%s1704 + $0x68] sm:$0xff]
        %v1719 = vld [vmem:[%s1704 + $0x70] sm:$0xff]
        %v1720 = vld [vmem:[%s1704 + $0x78] sm:$0xff]
        %v1721 = vld [vmem:[%s1704 + $0x80] sm:$0xff]
        %v1722 = vld [vmem:[%s1704 + $0x88] sm:$0xff]
        %v1723 = vld [vmem:[%s1704 + $0x90] sm:$0xff]
        %v1724 = vld [vmem:[%s1704 + $0x98] sm:$0xff]
        %v1725 = vld [vmem:[%s1704 + $0xa0] sm:$0xff]
        %v1726 = vld [vmem:[%s1704 + $0xa8] sm:$0xff]
        %v1727 = vld [vmem:[%s1704 + $0xb0] sm:$0xff]
        %v1728 = vld [vmem:[%s1704 + $0xb8] sm:$0xff]
        %v1729 = vld [vmem:[%s1704 + $0xc0] sm:$0xff]
        %v1730 = vld [vmem:[%s1704 + $0xc8] sm:$0xff]
        %v1731 = vld [vmem:[%s1704 + $0xd0] sm:$0xff]
        %v1732 = vld [vmem:[%s1704 + $0xd8] sm:$0xff]
        %v1733 = vld [vmem:[%s1704 + $0xe0] sm:$0xff]
        %v1734 = vld [vmem:[%s1704 + $0xe8] sm:$0xff]
        %v1735 = vld [vmem:[%s1704 + $0xf0] sm:$0xff]
        %v1736 = vld [vmem:[%s1704 + $0xf8] sm:$0xff]
        %v1737 = vrot.slane %v626, 2
        %v1738 = vrot.slane %v627, 2
        %1741 = vmatprep.subr.mxu0 0.0
        %1742 = vmatpush1.msra.mxu0 %v1720
        %1743 = vmatprep.subr.mxu0 0.0
        %1744 = vmatpush1.msra.mxu0 %v1719
        %1745 = vmatprep.subr.mxu0 0.0
        %1746 = vmatpush1.msra.mxu0 %v1718
        %1747 = vmatprep.subr.mxu0 0.0
        %1748 = vmatpush1.msra.mxu0 %v1717
        %1749 = vmatprep.subr.mxu0 0.0
        %1750 = vmatpush1.msra.mxu0 %v1716
        %1751 = vmatprep.subr.mxu0 0.0
        %1752 = vmatpush1.msra.mxu0 %v1715
        %1753 = vmatprep.subr.mxu0 0.0
        %1754 = vmatpush1.msra.mxu0 %v1714
        %1755 = vmatprep.subr.mxu0 0.0
        %1756 = vmatpush1.msra.mxu0 %v1713
        %1757 = vmatprep.subr.mxu0 0.0
        %1758 = vmatpush1.msra.mxu0 %v1712
        %1759 = vmatprep.subr.mxu0 0.0
        %1760 = vmatpush1.msra.mxu0 %v1711
        %1761 = vmatprep.subr.mxu0 0.0
        %1762 = vmatpush1.msra.mxu0 %v1710
        %1763 = vmatprep.subr.mxu0 0.0
        %1764 = vmatpush1.msra.mxu0 %v1709
        %1765 = vmatprep.subr.mxu0 0.0
        %1766 = vmatpush1.msra.mxu0 %v1708
        %1767 = vmatprep.subr.mxu0 0.0
        %1768 = vmatpush1.msra.mxu0 %v1707
        %1769 = vmatprep.subr.mxu0 0.0
        %1770 = vmatpush1.msra.mxu0 %v1706
        %1771 = vmatprep.subr.mxu0 0.0
        %1772 = vmatpush1.msra.mxu0 %v1705
        %1773 = vmatprep.subr.mxu0 0.0
        %1774 = vmatpush2.msra.mxu0 %v1736
        %1775 = vmatprep.subr.mxu0 0.0
        %1776 = vmatpush2.msra.mxu0 %v1735
        %1777 = vmatprep.subr.mxu0 0.0
        %1778 = vmatpush2.msra.mxu0 %v1734
        %1779 = vmatprep.subr.mxu0 0.0
        %1780 = vmatpush2.msra.mxu0 %v1733
        %1781 = vmatprep.subr.mxu0 0.0
        %1782 = vmatpush2.msra.mxu0 %v1732
        %1783 = vmatprep.subr.mxu0 0.0
        %1784 = vmatpush2.msra.mxu0 %v1731
        %1785 = vmatprep.subr.mxu0 0.0
        %1786 = vmatpush2.msra.mxu0 %v1730
        %1787 = vmatprep.subr.mxu0 0.0
        %1788 = vmatpush2.msra.mxu0 %v1729
        %1789 = vmatprep.subr.mxu0 0.0
        %1790 = vmatpush2.msra.mxu0 %v1728
        %1791 = vmatprep.subr.mxu0 0.0
        %1792 = vmatpush2.msra.mxu0 %v1727
        %1793 = vmatprep.subr.mxu0 0.0
        %1794 = vmatpush2.msra.mxu0 %v1726
        %1795 = vmatprep.subr.mxu0 0.0
        %1796 = vmatpush2.msra.mxu0 %v1725
        %1797 = vmatprep.subr.mxu0 0.0
        %1798 = vmatpush2.msra.mxu0 %v1724
        %1799 = vmatprep.subr.mxu0 0.0
        %1800 = vmatpush2.msra.mxu0 %v1723
        %1801 = vmatprep.subr.mxu0 0.0
        %1802 = vmatpush2.msra.mxu0 %v1722
        %1803 = vmatprep.subr.mxu0 0.0
        %1804 = vmatpush2.msra.mxu0 %v1721
        %1805 = vmatprep.mubr.f32.mxu0 %v1738
        %1806 = vmatmul.mubr.f32.gmra.mxu0 %v1737
        %v1807 = vpop.f32.mrf.mxu0
        %v1808 = vadd.f32 0.0, %v1807
        %v1809 = vpop.f32.mrf.mxu0
        %1810 = vdwg.mxu0
        %v1811 = vadd.f32 %v1703, %v1808
        %s1812 = scalar_lea.vmem %s3, 2816
        %v1813 = vld [vmem:[%s1812] sm:$0xff]
        %v1814 = vld [vmem:[%s1812 + $0x8] sm:$0xff]
        %v1815 = vld [vmem:[%s1812 + $0x10] sm:$0xff]
        %v1816 = vld [vmem:[%s1812 + $0x18] sm:$0xff]
        %v1817 = vld [vmem:[%s1812 + $0x20] sm:$0xff]
        %v1818 = vld [vmem:[%s1812 + $0x28] sm:$0xff]
        %v1819 = vld [vmem:[%s1812 + $0x30] sm:$0xff]
        %v1820 = vld [vmem:[%s1812 + $0x38] sm:$0xff]
        %v1821 = vld [vmem:[%s1812 + $0x40] sm:$0xff]
        %v1822 = vld [vmem:[%s1812 + $0x48] sm:$0xff]
        %v1823 = vld [vmem:[%s1812 + $0x50] sm:$0xff]
        %v1824 = vld [vmem:[%s1812 + $0x58] sm:$0xff]
        %v1825 = vld [vmem:[%s1812 + $0x60] sm:$0xff]
        %v1826 = vld [vmem:[%s1812 + $0x68] sm:$0xff]
        %v1827 = vld [vmem:[%s1812 + $0x70] sm:$0xff]
        %v1828 = vld [vmem:[%s1812 + $0x78] sm:$0xff]
        %v1829 = vld [vmem:[%s1812 + $0x80] sm:$0xff]
        %v1830 = vld [vmem:[%s1812 + $0x88] sm:$0xff]
        %v1831 = vld [vmem:[%s1812 + $0x90] sm:$0xff]
        %v1832 = vld [vmem:[%s1812 + $0x98] sm:$0xff]
        %v1833 = vld [vmem:[%s1812 + $0xa0] sm:$0xff]
        %v1834 = vld [vmem:[%s1812 + $0xa8] sm:$0xff]
        %v1835 = vld [vmem:[%s1812 + $0xb0] sm:$0xff]
        %v1836 = vld [vmem:[%s1812 + $0xb8] sm:$0xff]
        %v1837 = vld [vmem:[%s1812 + $0xc0] sm:$0xff]
        %v1838 = vld [vmem:[%s1812 + $0xc8] sm:$0xff]
        %v1839 = vld [vmem:[%s1812 + $0xd0] sm:$0xff]
        %v1840 = vld [vmem:[%s1812 + $0xd8] sm:$0xff]
        %v1841 = vld [vmem:[%s1812 + $0xe0] sm:$0xff]
        %v1842 = vld [vmem:[%s1812 + $0xe8] sm:$0xff]
        %v1843 = vld [vmem:[%s1812 + $0xf0] sm:$0xff]
        %v1844 = vld [vmem:[%s1812 + $0xf8] sm:$0xff]
        %v1845 = vrot.slane %v626, 3
        %v1846 = vrot.slane %v627, 3
        %1849 = vmatprep.subr.mxu0 0.0
        %1850 = vmatpush1.msra.mxu0 %v1828
        %1851 = vmatprep.subr.mxu0 0.0
        %1852 = vmatpush1.msra.mxu0 %v1827
        %1853 = vmatprep.subr.mxu0 0.0
        %1854 = vmatpush1.msra.mxu0 %v1826
        %1855 = vmatprep.subr.mxu0 0.0
        %1856 = vmatpush1.msra.mxu0 %v1825
        %1857 = vmatprep.subr.mxu0 0.0
        %1858 = vmatpush1.msra.mxu0 %v1824
        %1859 = vmatprep.subr.mxu0 0.0
        %1860 = vmatpush1.msra.mxu0 %v1823
        %1861 = vmatprep.subr.mxu0 0.0
        %1862 = vmatpush1.msra.mxu0 %v1822
        %1863 = vmatprep.subr.mxu0 0.0
        %1864 = vmatpush1.msra.mxu0 %v1821
        %1865 = vmatprep.subr.mxu0 0.0
        %1866 = vmatpush1.msra.mxu0 %v1820
        %1867 = vmatprep.subr.mxu0 0.0
        %1868 = vmatpush1.msra.mxu0 %v1819
        %1869 = vmatprep.subr.mxu0 0.0
        %1870 = vmatpush1.msra.mxu0 %v1818
        %1871 = vmatprep.subr.mxu0 0.0
        %1872 = vmatpush1.msra.mxu0 %v1817
        %1873 = vmatprep.subr.mxu0 0.0
        %1874 = vmatpush1.msra.mxu0 %v1816
        %1875 = vmatprep.subr.mxu0 0.0
        %1876 = vmatpush1.msra.mxu0 %v1815
        %1877 = vmatprep.subr.mxu0 0.0
        %1878 = vmatpush1.msra.mxu0 %v1814
        %1879 = vmatprep.subr.mxu0 0.0
        %1880 = vmatpush1.msra.mxu0 %v1813
        %1881 = vmatprep.subr.mxu0 0.0
        %1882 = vmatpush2.msra.mxu0 %v1844
        %1883 = vmatprep.subr.mxu0 0.0
        %1884 = vmatpush2.msra.mxu0 %v1843
        %1885 = vmatprep.subr.mxu0 0.0
        %1886 = vmatpush2.msra.mxu0 %v1842
        %1887 = vmatprep.subr.mxu0 0.0
        %1888 = vmatpush2.msra.mxu0 %v1841
        %1889 = vmatprep.subr.mxu0 0.0
        %1890 = vmatpush2.msra.mxu0 %v1840
        %1891 = vmatprep.subr.mxu0 0.0
        %1892 = vmatpush2.msra.mxu0 %v1839
        %1893 = vmatprep.subr.mxu0 0.0
        %1894 = vmatpush2.msra.mxu0 %v1838
        %1895 = vmatprep.subr.mxu0 0.0
        %1896 = vmatpush2.msra.mxu0 %v1837
        %1897 = vmatprep.subr.mxu0 0.0
        %1898 = vmatpush2.msra.mxu0 %v1836
        %1899 = vmatprep.subr.mxu0 0.0
        %1900 = vmatpush2.msra.mxu0 %v1835
        %1901 = vmatprep.subr.mxu0 0.0
        %1902 = vmatpush2.msra.mxu0 %v1834
        %1903 = vmatprep.subr.mxu0 0.0
        %1904 = vmatpush2.msra.mxu0 %v1833
        %1905 = vmatprep.subr.mxu0 0.0
        %1906 = vmatpush2.msra.mxu0 %v1832
        %1907 = vmatprep.subr.mxu0 0.0
        %1908 = vmatpush2.msra.mxu0 %v1831
        %1909 = vmatprep.subr.mxu0 0.0
        %1910 = vmatpush2.msra.mxu0 %v1830
        %1911 = vmatprep.subr.mxu0 0.0
        %1912 = vmatpush2.msra.mxu0 %v1829
        %1913 = vmatprep.mubr.f32.mxu0 %v1846
        %1914 = vmatmul.mubr.f32.gmra.mxu0 %v1845
        %v1915 = vpop.f32.mrf.mxu0
        %v1916 = vadd.f32 0.0, %v1915
        %v1917 = vpop.f32.mrf.mxu0
        %1918 = vdwg.mxu0
        %v1919 = vadd.f32 %v1811, %v1916
        %s1920 = scalar_lea.vmem %s3, 3072
        %v1921 = vld [vmem:[%s1920] sm:$0xff]
        %v1922 = vld [vmem:[%s1920 + $0x8] sm:$0xff]
        %v1923 = vld [vmem:[%s1920 + $0x10] sm:$0xff]
        %v1924 = vld [vmem:[%s1920 + $0x18] sm:$0xff]
        %v1925 = vld [vmem:[%s1920 + $0x20] sm:$0xff]
        %v1926 = vld [vmem:[%s1920 + $0x28] sm:$0xff]
        %v1927 = vld [vmem:[%s1920 + $0x30] sm:$0xff]
        %v1928 = vld [vmem:[%s1920 + $0x38] sm:$0xff]
        %v1929 = vld [vmem:[%s1920 + $0x40] sm:$0xff]
        %v1930 = vld [vmem:[%s1920 + $0x48] sm:$0xff]
        %v1931 = vld [vmem:[%s1920 + $0x50] sm:$0xff]
        %v1932 = vld [vmem:[%s1920 + $0x58] sm:$0xff]
        %v1933 = vld [vmem:[%s1920 + $0x60] sm:$0xff]
        %v1934 = vld [vmem:[%s1920 + $0x68] sm:$0xff]
        %v1935 = vld [vmem:[%s1920 + $0x70] sm:$0xff]
        %v1936 = vld [vmem:[%s1920 + $0x78] sm:$0xff]
        %v1937 = vld [vmem:[%s1920 + $0x80] sm:$0xff]
        %v1938 = vld [vmem:[%s1920 + $0x88] sm:$0xff]
        %v1939 = vld [vmem:[%s1920 + $0x90] sm:$0xff]
        %v1940 = vld [vmem:[%s1920 + $0x98] sm:$0xff]
        %v1941 = vld [vmem:[%s1920 + $0xa0] sm:$0xff]
        %v1942 = vld [vmem:[%s1920 + $0xa8] sm:$0xff]
        %v1943 = vld [vmem:[%s1920 + $0xb0] sm:$0xff]
        %v1944 = vld [vmem:[%s1920 + $0xb8] sm:$0xff]
        %v1945 = vld [vmem:[%s1920 + $0xc0] sm:$0xff]
        %v1946 = vld [vmem:[%s1920 + $0xc8] sm:$0xff]
        %v1947 = vld [vmem:[%s1920 + $0xd0] sm:$0xff]
        %v1948 = vld [vmem:[%s1920 + $0xd8] sm:$0xff]
        %v1949 = vld [vmem:[%s1920 + $0xe0] sm:$0xff]
        %v1950 = vld [vmem:[%s1920 + $0xe8] sm:$0xff]
        %v1951 = vld [vmem:[%s1920 + $0xf0] sm:$0xff]
        %v1952 = vld [vmem:[%s1920 + $0xf8] sm:$0xff]
        %v1953 = vrot.slane %v626, 4
        %v1954 = vrot.slane %v627, 4
        %1957 = vmatprep.subr.mxu0 0.0
        %1958 = vmatpush1.msra.mxu0 %v1936
        %1959 = vmatprep.subr.mxu0 0.0
        %1960 = vmatpush1.msra.mxu0 %v1935
        %1961 = vmatprep.subr.mxu0 0.0
        %1962 = vmatpush1.msra.mxu0 %v1934
        %1963 = vmatprep.subr.mxu0 0.0
        %1964 = vmatpush1.msra.mxu0 %v1933
        %1965 = vmatprep.subr.mxu0 0.0
        %1966 = vmatpush1.msra.mxu0 %v1932
        %1967 = vmatprep.subr.mxu0 0.0
        %1968 = vmatpush1.msra.mxu0 %v1931
        %1969 = vmatprep.subr.mxu0 0.0
        %1970 = vmatpush1.msra.mxu0 %v1930
        %1971 = vmatprep.subr.mxu0 0.0
        %1972 = vmatpush1.msra.mxu0 %v1929
        %1973 = vmatprep.subr.mxu0 0.0
        %1974 = vmatpush1.msra.mxu0 %v1928
        %1975 = vmatprep.subr.mxu0 0.0
        %1976 = vmatpush1.msra.mxu0 %v1927
        %1977 = vmatprep.subr.mxu0 0.0
        %1978 = vmatpush1.msra.mxu0 %v1926
        %1979 = vmatprep.subr.mxu0 0.0
        %1980 = vmatpush1.msra.mxu0 %v1925
        %1981 = vmatprep.subr.mxu0 0.0
        %1982 = vmatpush1.msra.mxu0 %v1924
        %1983 = vmatprep.subr.mxu0 0.0
        %1984 = vmatpush1.msra.mxu0 %v1923
        %1985 = vmatprep.subr.mxu0 0.0
        %1986 = vmatpush1.msra.mxu0 %v1922
        %1987 = vmatprep.subr.mxu0 0.0
        %1988 = vmatpush1.msra.mxu0 %v1921
        %1989 = vmatprep.subr.mxu0 0.0
        %1990 = vmatpush2.msra.mxu0 %v1952
        %1991 = vmatprep.subr.mxu0 0.0
        %1992 = vmatpush2.msra.mxu0 %v1951
        %1993 = vmatprep.subr.mxu0 0.0
        %1994 = vmatpush2.msra.mxu0 %v1950
        %1995 = vmatprep.subr.mxu0 0.0
        %1996 = vmatpush2.msra.mxu0 %v1949
        %1997 = vmatprep.subr.mxu0 0.0
        %1998 = vmatpush2.msra.mxu0 %v1948
        %1999 = vmatprep.subr.mxu0 0.0
        %2000 = vmatpush2.msra.mxu0 %v1947
        %2001 = vmatprep.subr.mxu0 0.0
        %2002 = vmatpush2.msra.mxu0 %v1946
        %2003 = vmatprep.subr.mxu0 0.0
        %2004 = vmatpush2.msra.mxu0 %v1945
        %2005 = vmatprep.subr.mxu0 0.0
        %2006 = vmatpush2.msra.mxu0 %v1944
        %2007 = vmatprep.subr.mxu0 0.0
        %2008 = vmatpush2.msra.mxu0 %v1943
        %2009 = vmatprep.subr.mxu0 0.0
        %2010 = vmatpush2.msra.mxu0 %v1942
        %2011 = vmatprep.subr.mxu0 0.0
        %2012 = vmatpush2.msra.mxu0 %v1941
        %2013 = vmatprep.subr.mxu0 0.0
        %2014 = vmatpush2.msra.mxu0 %v1940
        %2015 = vmatprep.subr.mxu0 0.0
        %2016 = vmatpush2.msra.mxu0 %v1939
        %2017 = vmatprep.subr.mxu0 0.0
        %2018 = vmatpush2.msra.mxu0 %v1938
        %2019 = vmatprep.subr.mxu0 0.0
        %2020 = vmatpush2.msra.mxu0 %v1937
        %2021 = vmatprep.mubr.f32.mxu0 %v1954
        %2022 = vmatmul.mubr.f32.gmra.mxu0 %v1953
        %v2023 = vpop.f32.mrf.mxu0
        %v2024 = vadd.f32 0.0, %v2023
        %v2025 = vpop.f32.mrf.mxu0
        %2026 = vdwg.mxu0
        %v2027 = vadd.f32 %v1919, %v2024
        %s2028 = scalar_lea.vmem %s3, 3328
        %v2029 = vld [vmem:[%s2028] sm:$0xff]
        %v2030 = vld [vmem:[%s2028 + $0x8] sm:$0xff]
        %v2031 = vld [vmem:[%s2028 + $0x10] sm:$0xff]
        %v2032 = vld [vmem:[%s2028 + $0x18] sm:$0xff]
        %v2033 = vld [vmem:[%s2028 + $0x20] sm:$0xff]
        %v2034 = vld [vmem:[%s2028 + $0x28] sm:$0xff]
        %v2035 = vld [vmem:[%s2028 + $0x30] sm:$0xff]
        %v2036 = vld [vmem:[%s2028 + $0x38] sm:$0xff]
        %v2037 = vld [vmem:[%s2028 + $0x40] sm:$0xff]
        %v2038 = vld [vmem:[%s2028 + $0x48] sm:$0xff]
        %v2039 = vld [vmem:[%s2028 + $0x50] sm:$0xff]
        %v2040 = vld [vmem:[%s2028 + $0x58] sm:$0xff]
        %v2041 = vld [vmem:[%s2028 + $0x60] sm:$0xff]
        %v2042 = vld [vmem:[%s2028 + $0x68] sm:$0xff]
        %v2043 = vld [vmem:[%s2028 + $0x70] sm:$0xff]
        %v2044 = vld [vmem:[%s2028 + $0x78] sm:$0xff]
        %v2045 = vld [vmem:[%s2028 + $0x80] sm:$0xff]
        %v2046 = vld [vmem:[%s2028 + $0x88] sm:$0xff]
        %v2047 = vld [vmem:[%s2028 + $0x90] sm:$0xff]
        %v2048 = vld [vmem:[%s2028 + $0x98] sm:$0xff]
        %v2049 = vld [vmem:[%s2028 + $0xa0] sm:$0xff]
        %v2050 = vld [vmem:[%s2028 + $0xa8] sm:$0xff]
        %v2051 = vld [vmem:[%s2028 + $0xb0] sm:$0xff]
        %v2052 = vld [vmem:[%s2028 + $0xb8] sm:$0xff]
        %v2053 = vld [vmem:[%s2028 + $0xc0] sm:$0xff]
        %v2054 = vld [vmem:[%s2028 + $0xc8] sm:$0xff]
        %v2055 = vld [vmem:[%s2028 + $0xd0] sm:$0xff]
        %v2056 = vld [vmem:[%s2028 + $0xd8] sm:$0xff]
        %v2057 = vld [vmem:[%s2028 + $0xe0] sm:$0xff]
        %v2058 = vld [vmem:[%s2028 + $0xe8] sm:$0xff]
        %v2059 = vld [vmem:[%s2028 + $0xf0] sm:$0xff]
        %v2060 = vld [vmem:[%s2028 + $0xf8] sm:$0xff]
        %v2061 = vrot.slane %v626, 5
        %v2062 = vrot.slane %v627, 5
        %2065 = vmatprep.subr.mxu0 0.0
        %2066 = vmatpush1.msra.mxu0 %v2044
        %2067 = vmatprep.subr.mxu0 0.0
        %2068 = vmatpush1.msra.mxu0 %v2043
        %2069 = vmatprep.subr.mxu0 0.0
        %2070 = vmatpush1.msra.mxu0 %v2042
        %2071 = vmatprep.subr.mxu0 0.0
        %2072 = vmatpush1.msra.mxu0 %v2041
        %2073 = vmatprep.subr.mxu0 0.0
        %2074 = vmatpush1.msra.mxu0 %v2040
        %2075 = vmatprep.subr.mxu0 0.0
        %2076 = vmatpush1.msra.mxu0 %v2039
        %2077 = vmatprep.subr.mxu0 0.0
        %2078 = vmatpush1.msra.mxu0 %v2038
        %2079 = vmatprep.subr.mxu0 0.0
        %2080 = vmatpush1.msra.mxu0 %v2037
        %2081 = vmatprep.subr.mxu0 0.0
        %2082 = vmatpush1.msra.mxu0 %v2036
        %2083 = vmatprep.subr.mxu0 0.0
        %2084 = vmatpush1.msra.mxu0 %v2035
        %2085 = vmatprep.subr.mxu0 0.0
        %2086 = vmatpush1.msra.mxu0 %v2034
        %2087 = vmatprep.subr.mxu0 0.0
        %2088 = vmatpush1.msra.mxu0 %v2033
        %2089 = vmatprep.subr.mxu0 0.0
        %2090 = vmatpush1.msra.mxu0 %v2032
        %2091 = vmatprep.subr.mxu0 0.0
        %2092 = vmatpush1.msra.mxu0 %v2031
        %2093 = vmatprep.subr.mxu0 0.0
        %2094 = vmatpush1.msra.mxu0 %v2030
        %2095 = vmatprep.subr.mxu0 0.0
        %2096 = vmatpush1.msra.mxu0 %v2029
        %2097 = vmatprep.subr.mxu0 0.0
        %2098 = vmatpush2.msra.mxu0 %v2060
        %2099 = vmatprep.subr.mxu0 0.0
        %2100 = vmatpush2.msra.mxu0 %v2059
        %2101 = vmatprep.subr.mxu0 0.0
        %2102 = vmatpush2.msra.mxu0 %v2058
        %2103 = vmatprep.subr.mxu0 0.0
        %2104 = vmatpush2.msra.mxu0 %v2057
        %2105 = vmatprep.subr.mxu0 0.0
        %2106 = vmatpush2.msra.mxu0 %v2056
        %2107 = vmatprep.subr.mxu0 0.0
        %2108 = vmatpush2.msra.mxu0 %v2055
        %2109 = vmatprep.subr.mxu0 0.0
        %2110 = vmatpush2.msra.mxu0 %v2054
        %2111 = vmatprep.subr.mxu0 0.0
        %2112 = vmatpush2.msra.mxu0 %v2053
        %2113 = vmatprep.subr.mxu0 0.0
        %2114 = vmatpush2.msra.mxu0 %v2052
        %2115 = vmatprep.subr.mxu0 0.0
        %2116 = vmatpush2.msra.mxu0 %v2051
        %2117 = vmatprep.subr.mxu0 0.0
        %2118 = vmatpush2.msra.mxu0 %v2050
        %2119 = vmatprep.subr.mxu0 0.0
        %2120 = vmatpush2.msra.mxu0 %v2049
        %2121 = vmatprep.subr.mxu0 0.0
        %2122 = vmatpush2.msra.mxu0 %v2048
        %2123 = vmatprep.subr.mxu0 0.0
        %2124 = vmatpush2.msra.mxu0 %v2047
        %2125 = vmatprep.subr.mxu0 0.0
        %2126 = vmatpush2.msra.mxu0 %v2046
        %2127 = vmatprep.subr.mxu0 0.0
        %2128 = vmatpush2.msra.mxu0 %v2045
        %2129 = vmatprep.mubr.f32.mxu0 %v2062
        %2130 = vmatmul.mubr.f32.gmra.mxu0 %v2061
        %v2131 = vpop.f32.mrf.mxu0
        %v2132 = vadd.f32 0.0, %v2131
        %v2133 = vpop.f32.mrf.mxu0
        %2134 = vdwg.mxu0
        %v2135 = vadd.f32 %v2027, %v2132
        %s2136 = scalar_lea.vmem %s3, 3584
        %v2137 = vld [vmem:[%s2136] sm:$0xff]
        %v2138 = vld [vmem:[%s2136 + $0x8] sm:$0xff]
        %v2139 = vld [vmem:[%s2136 + $0x10] sm:$0xff]
        %v2140 = vld [vmem:[%s2136 + $0x18] sm:$0xff]
        %v2141 = vld [vmem:[%s2136 + $0x20] sm:$0xff]
        %v2142 = vld [vmem:[%s2136 + $0x28] sm:$0xff]
        %v2143 = vld [vmem:[%s2136 + $0x30] sm:$0xff]
        %v2144 = vld [vmem:[%s2136 + $0x38] sm:$0xff]
        %v2145 = vld [vmem:[%s2136 + $0x40] sm:$0xff]
        %v2146 = vld [vmem:[%s2136 + $0x48] sm:$0xff]
        %v2147 = vld [vmem:[%s2136 + $0x50] sm:$0xff]
        %v2148 = vld [vmem:[%s2136 + $0x58] sm:$0xff]
        %v2149 = vld [vmem:[%s2136 + $0x60] sm:$0xff]
        %v2150 = vld [vmem:[%s2136 + $0x68] sm:$0xff]
        %v2151 = vld [vmem:[%s2136 + $0x70] sm:$0xff]
        %v2152 = vld [vmem:[%s2136 + $0x78] sm:$0xff]
        %v2153 = vld [vmem:[%s2136 + $0x80] sm:$0xff]
        %v2154 = vld [vmem:[%s2136 + $0x88] sm:$0xff]
        %v2155 = vld [vmem:[%s2136 + $0x90] sm:$0xff]
        %v2156 = vld [vmem:[%s2136 + $0x98] sm:$0xff]
        %v2157 = vld [vmem:[%s2136 + $0xa0] sm:$0xff]
        %v2158 = vld [vmem:[%s2136 + $0xa8] sm:$0xff]
        %v2159 = vld [vmem:[%s2136 + $0xb0] sm:$0xff]
        %v2160 = vld [vmem:[%s2136 + $0xb8] sm:$0xff]
        %v2161 = vld [vmem:[%s2136 + $0xc0] sm:$0xff]
        %v2162 = vld [vmem:[%s2136 + $0xc8] sm:$0xff]
        %v2163 = vld [vmem:[%s2136 + $0xd0] sm:$0xff]
        %v2164 = vld [vmem:[%s2136 + $0xd8] sm:$0xff]
        %v2165 = vld [vmem:[%s2136 + $0xe0] sm:$0xff]
        %v2166 = vld [vmem:[%s2136 + $0xe8] sm:$0xff]
        %v2167 = vld [vmem:[%s2136 + $0xf0] sm:$0xff]
        %v2168 = vld [vmem:[%s2136 + $0xf8] sm:$0xff]
        %v2169 = vrot.slane %v626, 6
        %v2170 = vrot.slane %v627, 6
        %2173 = vmatprep.subr.mxu0 0.0
        %2174 = vmatpush1.msra.mxu0 %v2152
        %2175 = vmatprep.subr.mxu0 0.0
        %2176 = vmatpush1.msra.mxu0 %v2151
        %2177 = vmatprep.subr.mxu0 0.0
        %2178 = vmatpush1.msra.mxu0 %v2150
        %2179 = vmatprep.subr.mxu0 0.0
        %2180 = vmatpush1.msra.mxu0 %v2149
        %2181 = vmatprep.subr.mxu0 0.0
        %2182 = vmatpush1.msra.mxu0 %v2148
        %2183 = vmatprep.subr.mxu0 0.0
        %2184 = vmatpush1.msra.mxu0 %v2147
        %2185 = vmatprep.subr.mxu0 0.0
        %2186 = vmatpush1.msra.mxu0 %v2146
        %2187 = vmatprep.subr.mxu0 0.0
        %2188 = vmatpush1.msra.mxu0 %v2145
        %2189 = vmatprep.subr.mxu0 0.0
        %2190 = vmatpush1.msra.mxu0 %v2144
        %2191 = vmatprep.subr.mxu0 0.0
        %2192 = vmatpush1.msra.mxu0 %v2143
        %2193 = vmatprep.subr.mxu0 0.0
        %2194 = vmatpush1.msra.mxu0 %v2142
        %2195 = vmatprep.subr.mxu0 0.0
        %2196 = vmatpush1.msra.mxu0 %v2141
        %2197 = vmatprep.subr.mxu0 0.0
        %2198 = vmatpush1.msra.mxu0 %v2140
        %2199 = vmatprep.subr.mxu0 0.0
        %2200 = vmatpush1.msra.mxu0 %v2139
        %2201 = vmatprep.subr.mxu0 0.0
        %2202 = vmatpush1.msra.mxu0 %v2138
        %2203 = vmatprep.subr.mxu0 0.0
        %2204 = vmatpush1.msra.mxu0 %v2137
        %2205 = vmatprep.subr.mxu0 0.0
        %2206 = vmatpush2.msra.mxu0 %v2168
        %2207 = vmatprep.subr.mxu0 0.0
        %2208 = vmatpush2.msra.mxu0 %v2167
        %2209 = vmatprep.subr.mxu0 0.0
        %2210 = vmatpush2.msra.mxu0 %v2166
        %2211 = vmatprep.subr.mxu0 0.0
        %2212 = vmatpush2.msra.mxu0 %v2165
        %2213 = vmatprep.subr.mxu0 0.0
        %2214 = vmatpush2.msra.mxu0 %v2164
        %2215 = vmatprep.subr.mxu0 0.0
        %2216 = vmatpush2.msra.mxu0 %v2163
        %2217 = vmatprep.subr.mxu0 0.0
        %2218 = vmatpush2.msra.mxu0 %v2162
        %2219 = vmatprep.subr.mxu0 0.0
        %2220 = vmatpush2.msra.mxu0 %v2161
        %2221 = vmatprep.subr.mxu0 0.0
        %2222 = vmatpush2.msra.mxu0 %v2160
        %2223 = vmatprep.subr.mxu0 0.0
        %2224 = vmatpush2.msra.mxu0 %v2159
        %2225 = vmatprep.subr.mxu0 0.0
        %2226 = vmatpush2.msra.mxu0 %v2158
        %2227 = vmatprep.subr.mxu0 0.0
        %2228 = vmatpush2.msra.mxu0 %v2157
        %2229 = vmatprep.subr.mxu0 0.0
        %2230 = vmatpush2.msra.mxu0 %v2156
        %2231 = vmatprep.subr.mxu0 0.0
        %2232 = vmatpush2.msra.mxu0 %v2155
        %2233 = vmatprep.subr.mxu0 0.0
        %2234 = vmatpush2.msra.mxu0 %v2154
        %2235 = vmatprep.subr.mxu0 0.0
        %2236 = vmatpush2.msra.mxu0 %v2153
        %2237 = vmatprep.mubr.f32.mxu0 %v2170
        %2238 = vmatmul.mubr.f32.gmra.mxu0 %v2169
        %v2239 = vpop.f32.mrf.mxu0
        %v2240 = vadd.f32 0.0, %v2239
        %v2241 = vpop.f32.mrf.mxu0
        %2242 = vdwg.mxu0
        %v2243 = vadd.f32 %v2135, %v2240
        %s2244 = scalar_lea.vmem %s3, 3840
        %v2245 = vld [vmem:[%s2244] sm:$0xff]
        %v2246 = vld [vmem:[%s2244 + $0x8] sm:$0xff]
        %v2247 = vld [vmem:[%s2244 + $0x10] sm:$0xff]
        %v2248 = vld [vmem:[%s2244 + $0x18] sm:$0xff]
        %v2249 = vld [vmem:[%s2244 + $0x20] sm:$0xff]
        %v2250 = vld [vmem:[%s2244 + $0x28] sm:$0xff]
        %v2251 = vld [vmem:[%s2244 + $0x30] sm:$0xff]
        %v2252 = vld [vmem:[%s2244 + $0x38] sm:$0xff]
        %v2253 = vld [vmem:[%s2244 + $0x40] sm:$0xff]
        %v2254 = vld [vmem:[%s2244 + $0x48] sm:$0xff]
        %v2255 = vld [vmem:[%s2244 + $0x50] sm:$0xff]
        %v2256 = vld [vmem:[%s2244 + $0x58] sm:$0xff]
        %v2257 = vld [vmem:[%s2244 + $0x60] sm:$0xff]
        %v2258 = vld [vmem:[%s2244 + $0x68] sm:$0xff]
        %v2259 = vld [vmem:[%s2244 + $0x70] sm:$0xff]
        %v2260 = vld [vmem:[%s2244 + $0x78] sm:$0xff]
        %v2261 = vld [vmem:[%s2244 + $0x80] sm:$0xff]
        %v2262 = vld [vmem:[%s2244 + $0x88] sm:$0xff]
        %v2263 = vld [vmem:[%s2244 + $0x90] sm:$0xff]
        %v2264 = vld [vmem:[%s2244 + $0x98] sm:$0xff]
        %v2265 = vld [vmem:[%s2244 + $0xa0] sm:$0xff]
        %v2266 = vld [vmem:[%s2244 + $0xa8] sm:$0xff]
        %v2267 = vld [vmem:[%s2244 + $0xb0] sm:$0xff]
        %v2268 = vld [vmem:[%s2244 + $0xb8] sm:$0xff]
        %v2269 = vld [vmem:[%s2244 + $0xc0] sm:$0xff]
        %v2270 = vld [vmem:[%s2244 + $0xc8] sm:$0xff]
        %v2271 = vld [vmem:[%s2244 + $0xd0] sm:$0xff]
        %v2272 = vld [vmem:[%s2244 + $0xd8] sm:$0xff]
        %v2273 = vld [vmem:[%s2244 + $0xe0] sm:$0xff]
        %v2274 = vld [vmem:[%s2244 + $0xe8] sm:$0xff]
        %v2275 = vld [vmem:[%s2244 + $0xf0] sm:$0xff]
        %v2276 = vld [vmem:[%s2244 + $0xf8] sm:$0xff]
        %v2277 = vrot.slane %v626, 7
        %v2278 = vrot.slane %v627, 7
        %2281 = vmatprep.subr.mxu0 0.0
        %2282 = vmatpush1.msra.mxu0 %v2260
        %2283 = vmatprep.subr.mxu0 0.0
        %2284 = vmatpush1.msra.mxu0 %v2259
        %2285 = vmatprep.subr.mxu0 0.0
        %2286 = vmatpush1.msra.mxu0 %v2258
        %2287 = vmatprep.subr.mxu0 0.0
        %2288 = vmatpush1.msra.mxu0 %v2257
        %2289 = vmatprep.subr.mxu0 0.0
        %2290 = vmatpush1.msra.mxu0 %v2256
        %2291 = vmatprep.subr.mxu0 0.0
        %2292 = vmatpush1.msra.mxu0 %v2255
        %2293 = vmatprep.subr.mxu0 0.0
        %2294 = vmatpush1.msra.mxu0 %v2254
        %2295 = vmatprep.subr.mxu0 0.0
        %2296 = vmatpush1.msra.mxu0 %v2253
        %2297 = vmatprep.subr.mxu0 0.0
        %2298 = vmatpush1.msra.mxu0 %v2252
        %2299 = vmatprep.subr.mxu0 0.0
        %2300 = vmatpush1.msra.mxu0 %v2251
        %2301 = vmatprep.subr.mxu0 0.0
        %2302 = vmatpush1.msra.mxu0 %v2250
        %2303 = vmatprep.subr.mxu0 0.0
        %2304 = vmatpush1.msra.mxu0 %v2249
        %2305 = vmatprep.subr.mxu0 0.0
        %2306 = vmatpush1.msra.mxu0 %v2248
        %2307 = vmatprep.subr.mxu0 0.0
        %2308 = vmatpush1.msra.mxu0 %v2247
        %2309 = vmatprep.subr.mxu0 0.0
        %2310 = vmatpush1.msra.mxu0 %v2246
        %2311 = vmatprep.subr.mxu0 0.0
        %2312 = vmatpush1.msra.mxu0 %v2245
        %2313 = vmatprep.subr.mxu0 0.0
        %2314 = vmatpush2.msra.mxu0 %v2276
        %2315 = vmatprep.subr.mxu0 0.0
        %2316 = vmatpush2.msra.mxu0 %v2275
        %2317 = vmatprep.subr.mxu0 0.0
        %2318 = vmatpush2.msra.mxu0 %v2274
        %2319 = vmatprep.subr.mxu0 0.0
        %2320 = vmatpush2.msra.mxu0 %v2273
        %2321 = vmatprep.subr.mxu0 0.0
        %2322 = vmatpush2.msra.mxu0 %v2272
        %2323 = vmatprep.subr.mxu0 0.0
        %2324 = vmatpush2.msra.mxu0 %v2271
        %2325 = vmatprep.subr.mxu0 0.0
        %2326 = vmatpush2.msra.mxu0 %v2270
        %2327 = vmatprep.subr.mxu0 0.0
        %2328 = vmatpush2.msra.mxu0 %v2269
        %2329 = vmatprep.subr.mxu0 0.0
        %2330 = vmatpush2.msra.mxu0 %v2268
        %2331 = vmatprep.subr.mxu0 0.0
        %2332 = vmatpush2.msra.mxu0 %v2267
        %2333 = vmatprep.subr.mxu0 0.0
        %2334 = vmatpush2.msra.mxu0 %v2266
        %2335 = vmatprep.subr.mxu0 0.0
        %2336 = vmatpush2.msra.mxu0 %v2265
        %2337 = vmatprep.subr.mxu0 0.0
        %2338 = vmatpush2.msra.mxu0 %v2264
        %2339 = vmatprep.subr.mxu0 0.0
        %2340 = vmatpush2.msra.mxu0 %v2263
        %2341 = vmatprep.subr.mxu0 0.0
        %2342 = vmatpush2.msra.mxu0 %v2262
        %2343 = vmatprep.subr.mxu0 0.0
        %2344 = vmatpush2.msra.mxu0 %v2261
        %2345 = vmatprep.mubr.f32.mxu0 %v2278
        %2346 = vmatmul.mubr.f32.gmra.mxu0 %v2277
        %v2347 = vpop.f32.mrf.mxu0
        %v2348 = vadd.f32 0.0, %v2347
        %v2349 = vpop.f32.mrf.mxu0
        %2350 = vdwg.mxu0
        %v2351 = vadd.f32 %v2243, %v2348
        %2352 = vst [vmem:[%s216] sm:$0x1] %v2351
        %s2353 = sand.u32 %s137, 1
        %s2354 = scalar_lea.sflag [#allocation3], %s2353
        %s2355 = sand.u32 %s137, 1
        %s2356 = scalar_lea.vmem [#allocation2], %s2355
        // Predicated region
        $region41: #{convnet3_forward.1} parent=39 // pred_check
          %p2357 = pneg %p147
        $region42: #{convnet3_forward.1} parent=39 // pred_check_branch
          %2359 = sbr.rel (%p2357) target = $region44
        $region43: #{convnet3_forward.1} parent=39 // pred_region
          %s2361 = ssub.s32 16, 16
          %2362 = vsyncadd %s2354, %s2361
          %s2363 = smul.addr %s19, 16
          %s2364 = scalar_lea.hbm %s5, %s2363
          %s2366 = sshll.u32 %s2356, 4
          %s2367 = int_to_ptr.vmem [resolvable:$true] %s2366
          %2369 = dma.vmem_to_hbm [thread:$0]  %s2367, 16, %s2364, %s2354
        $region44: #{convnet3_forward.1} parent=39 // pred_fallthru
          _
      $region40: #{convnet3_forward.1} parent=5 // pred_fallthru
        _
      %p2370 = scmp.le.s32.totalorder 2, %s14
      // Predicated region
      $region45: #{convnet3_forward.1} parent=5 // pred_check
        %p2371 = pneg %p2370
      $region46: #{convnet3_forward.1} parent=5 // pred_check_branch
        %2373 = sbr.rel (%p2371) target = $region48
      $region47: #{convnet3_forward.1} parent=5 // pred_region
        %s2374 = ssub.s32 %s14, 2
        // Predicated region
        $region49: #{convnet3_forward.1} parent=47 // pred_check
          %p2375 = pneg %p153
        $region50: #{convnet3_forward.1} parent=47 // pred_check_branch
          %2377 = sbr.rel (%p2375) target = $region52
        $region51: #{convnet3_forward.1} parent=47 // pred_region
          %s2378 = sand.u32 %s138, 1
          %s2379 = scalar_lea.sflag [#allocation3], %s2378
          %s2380 = sand.u32 %s138, 1
          %s2381 = scalar_lea.vmem [#allocation2], %s2380
          %2382 = dma.done %s2379, 16
        $region52: #{convnet3_forward.1} parent=47 // pred_fallthru
          _
      $region48: #{convnet3_forward.1} parent=5 // pred_fallthru
        _
    $region6: #{convnet3_forward.1} parent=1 // loop_footer
      %s18 = sadd.s32 1, %s14
    $region7: #{convnet3_forward.1} parent=1 // loop_footer_branch
      %13 = sbr.rel target = $region3
    $region8: #{convnet3_forward.1} parent=1 // loop_exit
      _
    %2383 = vsyncpa [#allocation3], 1
    %s2384 = scalar_lea.sflag [#allocation3], 1
    %2385 = vsyncpa %s2384, 1

</llo_original>
